<compile_context>
chip_gen: v5e
topology: v5e:2x2
jax: 0.10.0
libtpu: 0.0.40
codegen_flags: <defaults>
</compile_context>

<pallas_src>
import functools
import numpy as np

import jax
import jax.numpy as jnp
from jax import lax
from jax.experimental import pallas as pl
from jax.experimental.pallas import tpu as pltpu

WORD_PAD_IDX = 0
IMP_VALUE = -100.0
NEG_FILL = -1e30  # fill for padded tag lanes (finite -> no inf/nan arithmetic)


# ---------------------------------------------------------------------------
# Fused Pallas kernel: fc + CRF numerator + log-partition + Viterbi (per batch)
# ---------------------------------------------------------------------------
def crf_fused_kernel(len_ref, wf_ref, tags_ref, w_ref, b_ref, start_ref,
                     end_ref, trans_ref, best_ref, score_ref, emout_ref,
                     em_sc, hist_ref, *, S, TPAD):
    # len_ref   : (B,)          i32  SMEM (scalar prefetch)
    # wf_ref    : (1, S, D)     f32  VMEM  (this batch's word features)
    # tags_ref  : (1, S, 2)     i32  VMEM  (col 0 = tags[t], col 1 = tags[t-1])
    # w_ref     : (D, TPAD)     f32  VMEM  (fc weight, resident)
    # b_ref     : (1, TPAD)     f32  VMEM  (fc bias)
    # start/end : (1, TPAD)     f32  VMEM
    # trans_ref : (TPAD, TPAD)  f32  VMEM
    # best_ref  : (1, 1, S)     i32  VMEM out (padded Viterbi path)
    # score_ref : (1, 1, 128)   f32  VMEM out (lane 0 = numerator, lane 1 = logZ)
    # emout_ref : (1, S, TPAD)  f32  VMEM out (emissions = fc output)
    # em_sc     : (S, TPAD)     f32  VMEM scratch
    # hist_ref  : (S, TPAD)     i32  VMEM scratch (Viterbi backpointers)
    b = pl.program_id(0)
    seq_len = len_ref[b]
    seq_end = seq_len - 1

    # ------------------- fused fc: emissions for this batch -------------------
    x = wf_ref[0]                                                   # (S, D)
    em = jnp.dot(x, w_ref[...], preferred_element_type=jnp.float32) + b_ref[...]
    em_sc[...] = em                                                 # (S, TPAD)
    emout_ref[0] = em

    start = start_ref[...]                                          # (1, TPAD)
    end = end_ref[...]                                              # (1, TPAD)
    trans = trans_ref[...]                                          # (TPAD, TPAD)

    tag_row = lax.broadcasted_iota(jnp.int32, (1, TPAD), 1)
    tag_mat = lax.broadcasted_iota(jnp.int32, (S, TPAD), 1)
    prev_mat = lax.broadcasted_iota(jnp.int32, (TPAD, TPAD), 0)
    s_col = lax.broadcasted_iota(jnp.int32, (S, 1), 0)
    time_row = lax.broadcasted_iota(jnp.int32, (1, S), 1)

    # ---------------- numerator: gold path score (vectorized) ----------------
    t2 = tags_ref[0]                                                # (S, 2) i32
    tags_cur = t2[:, 0:1]                                           # (S, 1)
    tags_prev = t2[:, 1:2]                                          # (S, 1)
    oh_cur = (tag_mat == tags_cur).astype(jnp.float32)              # (S, TPAD)
    oh_prev = (tag_mat == tags_prev).astype(jnp.float32)            # (S, TPAD)
    mask_col = (s_col < seq_len).astype(jnp.float32)                # (S, 1)
    tr_valid = jnp.logical_and(s_col >= 1, s_col < seq_len).astype(jnp.float32)

    em_term = jnp.sum(em * oh_cur * mask_col)
    # one-hot gather of trans[tags[t-1], :] rows via a small MXU matmul
    tr_rows = jnp.dot(oh_prev, trans, preferred_element_type=jnp.float32)
    tr_term = jnp.sum(tr_rows * oh_cur * tr_valid)
    start_term = jnp.sum(start * oh_cur[0:1, :])
    last_sel = (s_col == seq_end).astype(jnp.float32)
    oh_last = jnp.sum(oh_cur * last_sel, axis=0, keepdims=True)     # (1, TPAD)
    end_term = jnp.sum(end * oh_last)
    num = em_term + tr_term + start_term + end_term

    # ------ fused forward (log-partition) + Viterbi recursion over time ------
    score0 = start + em[0:1, :]                                     # (1, TPAD)
    score0_col = jnp.transpose(score0)                              # (TPAD, 1)

    def step(t, carry):
        acol, vcol = carry                                          # (TPAD, 1) each
        em_t = em_sc[pl.ds(t, 1), :]                                # (1, TPAD)
        on = t < seq_len

        # forward / logsumexp
        acand = acol + trans + em_t                                 # (TPAD, TPAD)
        amax = jnp.max(acand, axis=0, keepdims=True)                # (1, TPAD)
        anew = amax + jnp.log(jnp.sum(jnp.exp(acand - amax),
                                      axis=0, keepdims=True))
        acol = jnp.where(on, jnp.transpose(anew), acol)

        # Viterbi (shares em_t / trans with the forward pass)
        vcand = vcol + trans + em_t                                 # (TPAD, TPAD)
        vmax = jnp.max(vcand, axis=0, keepdims=True)                # (1, TPAD)
        bp = jnp.min(jnp.where(vcand == vmax, prev_mat, TPAD),
                     axis=0, keepdims=True)                         # argmax (first idx)
        hist_ref[pl.ds(t, 1), :] = bp.astype(jnp.int32)
        vcol = jnp.where(on, jnp.transpose(vmax), vcol)
        return acol, vcol

    acol, vcol = lax.fori_loop(1, S, step, (score0_col, score0_col))

    # ------------------------------- finalize --------------------------------
    afinal = jnp.transpose(acol) + end                              # (1, TPAD)
    dmax = jnp.max(afinal)
    den = dmax + jnp.log(jnp.sum(jnp.exp(afinal - dmax)))

    vfinal = jnp.transpose(vcol) + end                              # (1, TPAD)
    fmax = jnp.max(vfinal)
    best_last = jnp.min(jnp.where(vfinal == fmax, tag_row, TPAD)).astype(jnp.int32)

    # lane-dense packed scalar outputs: lane 0 = numerator, lane 1 = log-partition
    lane = lax.broadcasted_iota(jnp.int32, (1, 128), 1)
    score_ref[0] = (jnp.where(lane == 0, num, 0.0)
                    + jnp.where(lane == 1, den, 0.0))

    # --------------------------- Viterbi backtrack ---------------------------
    path = jnp.where(time_row == seq_end, best_last, 0)             # (1, S) i32

    def bt(i, carry):
        cur, p = carry
        t = S - 2 - i
        hrow = hist_ref[pl.ds(t + 1, 1), :]                         # (1, TPAD)
        prev = jnp.sum(jnp.where(tag_row == cur, hrow, 0)).astype(jnp.int32)
        valid = t < seq_end
        new_cur = jnp.where(valid, prev, cur)
        p = jnp.where(jnp.logical_and(valid, time_row == t), new_cur, p)
        return new_cur, p

    if S >= 2:
        _, path = lax.fori_loop(0, S - 1, bt, (best_last, path))
    best_ref[0] = path


def crf_fused_pallas(lengths, wf_b, tags2, w_pad, b_pad, start_pad, end_pad,
                     trans_pad):
    B, S, D = wf_b.shape
    TPAD = w_pad.shape[1]
    kernel = functools.partial(crf_fused_kernel, S=S, TPAD=TPAD)

    grid_spec = pltpu.PrefetchScalarGridSpec(
        num_scalar_prefetch=1,                       # lengths -> SMEM
        grid=(B,),
        in_specs=[
            pl.BlockSpec((1, S, D), lambda b, lens: (b, 0, 0)),      # word features
            pl.BlockSpec((1, S, 2), lambda b, lens: (b, 0, 0)),      # (cur, prev) tags
            pl.BlockSpec((D, TPAD), lambda b, lens: (0, 0)),         # fc weight (resident)
            pl.BlockSpec((1, TPAD), lambda b, lens: (0, 0)),         # fc bias
            pl.BlockSpec((1, TPAD), lambda b, lens: (0, 0)),         # start transitions
            pl.BlockSpec((1, TPAD), lambda b, lens: (0, 0)),         # end transitions
            pl.BlockSpec((TPAD, TPAD), lambda b, lens: (0, 0)),      # transitions
        ],
        out_specs=(
            pl.BlockSpec((1, 1, S), lambda b, lens: (b, 0, 0)),      # Viterbi paths
            pl.BlockSpec((1, 1, 128), lambda b, lens: (b, 0, 0)),    # packed scalars
            pl.BlockSpec((1, S, TPAD), lambda b, lens: (b, 0, 0)),   # emissions
        ),
        scratch_shapes=[
            pltpu.VMEM((S, TPAD), jnp.float32),                      # emissions scratch
            pltpu.VMEM((S, TPAD), jnp.int32),                        # backpointers
        ],
    )
    best, scores, em_out = pl.pallas_call(
        kernel,
        grid_spec=grid_spec,
        out_shape=(
            jax.ShapeDtypeStruct((B, 1, S), jnp.int32),
            jax.ShapeDtypeStruct((B, 1, 128), jnp.float32),
            jax.ShapeDtypeStruct((B, S, TPAD), jnp.float32),
        ),
        compiler_params=pltpu.CompilerParams(
            dimension_semantics=("parallel",),       # megacore-shard batches (v7x)
            vmem_limit_bytes=32 * 1024 * 1024),
    )(lengths, wf_b, tags2, w_pad, b_pad, start_pad, end_pad, trans_pad)
    return best, scores, em_out


# ---------------------------------------------------------------------------
# Module wrapper (glue): CRF.forward(words, word_features, tags)
# ---------------------------------------------------------------------------
def crf_forward(words, word_features, tags, params):
    S, B, D = word_features.shape
    T = params["fc_w"].shape[0]
    TPAD = ((T + 127) // 128) * 128                  # lane-dense tag dimension

    # ---- pad parameters to the lane-dense tag dimension ----
    w_pad = jnp.zeros((D, TPAD), jnp.float32).at[:, :T].set(
        params["fc_w"].T.astype(jnp.float32))
    b_pad = jnp.zeros((1, TPAD), jnp.float32).at[0, :T].set(
        params["fc_b"].astype(jnp.float32))
    start_pad = jnp.full((1, TPAD), NEG_FILL, jnp.float32).at[0, :T].set(
        params["start"].astype(jnp.float32))
    end_pad = jnp.full((1, TPAD), NEG_FILL, jnp.float32).at[0, :T].set(
        params["end"].astype(jnp.float32))
    trans_pad = jnp.full((TPAD, TPAD), NEG_FILL, jnp.float32).at[:T, :T].set(
        params["trans"].astype(jnp.float32))

    # ---- batch-major views / scalar metadata ----
    # NOTE: torchcrf requires mask[0] to be all ones (first timestep valid).
    mask = (words != WORD_PAD_IDX).astype(jnp.int32)                 # (S, B)
    lengths = jnp.sum(mask, axis=0).astype(jnp.int32)                # (B,)
    wf_b = jnp.transpose(word_features, (1, 0, 2)).astype(jnp.float32)  # (B, S, D)
    tags_b = tags.T.astype(jnp.int32)                                # (B, S)
    tags_prev = jnp.concatenate([tags_b[:, :1], tags_b[:, :-1]], axis=1)
    tags2 = jnp.stack([tags_b, tags_prev], axis=-1)                  # (B, S, 2)

    best, scores, em_out = crf_fused_pallas(
        lengths, wf_b, tags2, w_pad, b_pad, start_pad, end_pad, trans_pad)

    num = scores[:, 0, 0]                             # gold-path score per batch
    den = scores[:, 0, 1]                             # log-partition per batch
    llh = jnp.sum(num - den)                          # torchcrf reduction='sum'
    crf_loss = -llh
    crf_out = best[:, 0, :].T                         # (S, B) padded Viterbi paths
    emissions = jnp.transpose(em_out[:, :, :T], (1, 0, 2))  # (S, B, T) fc output
    return crf_out, crf_loss, lengths, emissions, num, den


# ---------------------------------------------------------------------------
# Deterministic parameter init (mirrors CRF.__init__ / init_crf_transitions)
# ---------------------------------------------------------------------------
def init_crf_transitions_np(tag_names, start, end, trans, imp_value=IMP_VALUE):
    start = np.array(start, dtype=np.float32)
    end = np.array(end, dtype=np.float32)
    trans = np.array(trans, dtype=np.float32)
    for i, name in enumerate(tag_names):
        if name[0] in ("I", "L") or name == "<pad>":
            start[i] = imp_value
        if name[0] in ("B", "I"):
            end[i] = imp_value
    tag_is = {}
    for pos in ("B", "I", "O", "U", "L"):
        tag_is[pos] = [i for i, t in enumerate(tag_names) if t[0] == pos]
    tag_is["P"] = [i for i, t in enumerate(tag_names) if t == "tag"]
    impossible_position = {"B": "BOUP", "I": "BOUP", "O": "IL", "U": "IL"}
    for ft, to_list in impossible_position.items():
        for fi in tag_is[ft]:
            for tt in list(to_list):
                for ti in tag_is[tt]:
                    trans[fi, ti] = imp_value
    impossible_tags = {"B": "IL", "I": "IL"}
    for ft, to_list in impossible_tags.items():
        for fi in tag_is[ft]:
            for tt in list(to_list):
                for ti in tag_is[tt]:
                    if tag_names[fi].split("-")[1] != tag_names[ti].split("-")[1]:
                        trans[fi, ti] = imp_value
    return start, end, trans


# ---------------------------------------------------------------------------
# Pure numpy reference (torchcrf semantics) for correctness check
# ---------------------------------------------------------------------------
def _lse(x, axis):
    m = np.max(x, axis=axis, keepdims=True)
    return np.squeeze(m + np.log(np.sum(np.exp(x - m), axis=axis, keepdims=True)),
                      axis=axis)


def crf_reference(em, mask, tags, start, end, trans):
    S, B, T = em.shape
    mk = mask.astype(np.float64)
    # numerator
    num = start[tags[0]] + em[0, np.arange(B), tags[0]]
    for i in range(1, S):
        num = num + trans[tags[i - 1], tags[i]] * mk[i]
        num = num + em[i, np.arange(B), tags[i]] * mk[i]
    seq_ends = mask.sum(0).astype(int) - 1
    num = num + end[tags[seq_ends, np.arange(B)]]
    # denominator
    score = start[None, :] + em[0]
    for i in range(1, S):
        nxt = _lse(score[:, :, None] + trans[None] + em[i][:, None, :], axis=1)
        score = np.where(mk[i][:, None] > 0, nxt, score)
    den = _lse(score + end[None, :], axis=1)
    # viterbi
    vs = start[None, :] + em[0]
    history = []
    for i in range(1, S):
        cand = vs[:, :, None] + trans[None] + em[i][:, None, :]
        history.append(cand.argmax(axis=1))
        nxt = cand.max(axis=1)
        vs = np.where(mk[i][:, None] > 0, nxt, vs)
    vs = vs + end[None, :]
    paths = []
    for b in range(B):
        best = int(vs[b].argmax())
        p = [best]
        for h in reversed(history[: seq_ends[b]]):
            best = int(h[b][p[-1]])
            p.append(best)
        p.reverse()
        paths.append(p)
    return num, den, paths


# ---------------------------------------------------------------------------
if __name__ == "__main__":
    S, B, D = 8, 2, 32
    tag_names = ["<pad>", "O", "B-PER", "I-PER", "L-PER", "U-PER",
                 "B-LOC", "I-LOC", "L-LOC", "U-LOC"]
    T = len(tag_names)

    key = jax.random.PRNGKey(0)
    k_w, k_b, k_s, k_e, k_t, k_wd, k_tg, k_f = jax.random.split(key, 8)

    bound = 1.0 / np.sqrt(D)
    fc_w = jax.random.uniform(k_w, (T, D), jnp.float32, -bound, bound)
    fc_b = jax.random.uniform(k_b, (T,), jnp.float32, -bound, bound)
    start0 = jax.random.uniform(k_s, (T,), jnp.float32, -0.1, 0.1)
    end0 = jax.random.uniform(k_e, (T,), jnp.float32, -0.1, 0.1)
    trans0 = jax.random.uniform(k_t, (T, T), jnp.float32, -0.1, 0.1)
    start_np, end_np, trans_np = init_crf_transitions_np(
        tag_names, np.asarray(start0), np.asarray(end0), np.asarray(trans0))

    params = {
        "fc_w": fc_w, "fc_b": fc_b,
        "start": jnp.asarray(start_np),
        "end": jnp.asarray(end_np),
        "trans": jnp.asarray(trans_np),
    }

    # inputs: words / features / tags (seq-major). mask[0] must be all-on.
    seq_lengths = [S, 5]
    words = jax.random.randint(k_wd, (S, B), 1, 50, dtype=jnp.int32)
    words = words.at[seq_lengths[1]:, 1].set(WORD_PAD_IDX)
    tags = jax.random.randint(k_tg, (S, B), 0, T, dtype=jnp.int32)
    word_features = jax.random.normal(k_f, (S, B, D), jnp.float32)

    crf_out, crf_loss, lens, emissions, num, den = crf_forward(
        words, word_features, tags, params)
    jax.block_until_ready((crf_out, crf_loss, emissions))

    # ---- check the fused fc against a float64 numpy matmul (loose: MXU prec) ----
    em_fc64 = np.einsum("sbd,td->sbt",
                        np.asarray(word_features, np.float64),
                        np.asarray(fc_w, np.float64)) + np.asarray(fc_b, np.float64)
    assert np.allclose(np.asarray(emissions), em_fc64, rtol=2e-2, atol=2e-2)

    # ---- verify CRF math against pure-numpy torchcrf reference ----
    em_np = np.asarray(emissions, dtype=np.float64)
    mask_np = np.asarray((np.asarray(words) != WORD_PAD_IDX).astype(np.int32))
    ref_num, ref_den, ref_paths = crf_reference(
        em_np, mask_np, np.asarray(tags),
        start_np.astype(np.float64), end_np.astype(np.float64),
        trans_np.astype(np.float64))
    ref_loss = -np.sum(ref_num - ref_den)

    assert np.allclose(np.asarray(num), ref_num, rtol=1e-4, atol=1e-2)
    assert np.allclose(np.asarray(den), ref_den, rtol=1e-4, atol=1e-2)
    assert np.allclose(float(crf_loss), ref_loss, rtol=1e-4, atol=1e-2)
    out_np = np.asarray(crf_out)
    lens_np = np.asarray(lens)
    for b in range(B):
        assert list(out_np[: lens_np[b], b]) == ref_paths[b]

    print("KERNEL_OK")
</pallas_src>

<mosaic_0001>
module attributes {stable_mosaic.version = 11 : i64} {
  func.func @crf_fused_kernel(%arg0: i32, %arg1: memref<2xi32, #tpu.memory_space<smem>>, %arg2: memref<1x8x32xf32, #tpu.memory_space<vmem>>, %arg3: memref<1x8x2xi32, #tpu.memory_space<vmem>>, %arg4: memref<32x128xf32, #tpu.memory_space<vmem>>, %arg5: memref<1x128xf32, #tpu.memory_space<vmem>>, %arg6: memref<1x128xf32, #tpu.memory_space<vmem>>, %arg7: memref<1x128xf32, #tpu.memory_space<vmem>>, %arg8: memref<128x128xf32, #tpu.memory_space<vmem>>, %arg9: memref<1x1x8xi32, #tpu.memory_space<vmem>>, %arg10: memref<1x1x128xf32, #tpu.memory_space<vmem>>, %arg11: memref<1x8x128xf32, #tpu.memory_space<vmem>>, %arg12: memref<8x128xf32, #tpu.memory_space<vmem>>, %arg13: memref<8x128xi32, #tpu.memory_space<vmem>>) attributes {dimension_semantics = [#tpu.dimension_semantics<parallel>], iteration_bounds = array<i64: 2>, scalar_prefetch = 1 : i64, scratch_operands = 2 : i64, tpu.core_type = #tpu.core_type<tc>, window_params = [{transform_indices = @transform_0, window_bounds = array<i64: 1, 8, 32>}, {transform_indices = @transform_1, window_bounds = array<i64: 1, 8, 2>}, {pipeline_mode = #tpu.pipeline_mode<synchronous>, transform_indices = @transform_2, window_bounds = array<i64: 32, 128>}, {pipeline_mode = #tpu.pipeline_mode<synchronous>, transform_indices = @transform_3, window_bounds = array<i64: 1, 128>}, {pipeline_mode = #tpu.pipeline_mode<synchronous>, transform_indices = @transform_4, window_bounds = array<i64: 1, 128>}, {pipeline_mode = #tpu.pipeline_mode<synchronous>, transform_indices = @transform_5, window_bounds = array<i64: 1, 128>}, {pipeline_mode = #tpu.pipeline_mode<synchronous>, transform_indices = @transform_6, window_bounds = array<i64: 128, 128>}, {transform_indices = @transform_7, window_bounds = array<i64: 1, 1, 8>}, {transform_indices = @transform_8, window_bounds = array<i64: 1, 1, 128>}, {transform_indices = @transform_9, window_bounds = array<i64: 1, 8, 128>}]} {
    %0 = arith.index_cast %arg0 : i32 to index
    %1 = memref.load %arg1[%0] : memref<2xi32, #tpu.memory_space<smem>>
    %c1_i32 = arith.constant 1 : i32
    %2 = arith.subi %1, %c1_i32 : i32
    %c0 = arith.constant 0 : index
    %c0_0 = arith.constant 0 : index
    %c0_1 = arith.constant 0 : index
    %3 = vector.load %arg2[%c0, %c0_0, %c0_1] : memref<1x8x32xf32, #tpu.memory_space<vmem>>, vector<1x8x32xf32>
    %4 = vector.shape_cast %3 : vector<1x8x32xf32> to vector<8x32xf32>
    %c0_2 = arith.constant 0 : index
    %c0_3 = arith.constant 0 : index
    %5 = vector.load %arg4[%c0_2, %c0_3] : memref<32x128xf32, #tpu.memory_space<vmem>>, vector<32x128xf32>
    %cst = arith.constant dense<0.000000e+00> : vector<8x128xf32>
    %6 = tpu.matmul %4, %5, %cst {dimension_numbers = #tpu.dot_dimension_numbers<[1], [0], [0], [1], [0, 0, 1, 1], [], []>} : vector<8x32xf32>, vector<32x128xf32>, vector<8x128xf32> -> vector<8x128xf32>
    %c0_4 = arith.constant 0 : index
    %c0_5 = arith.constant 0 : index
    %7 = vector.load %arg5[%c0_4, %c0_5] : memref<1x128xf32, #tpu.memory_space<vmem>>, vector<1x128xf32>
    %8 = vector.broadcast %7 : vector<1x128xf32> to vector<8x128xf32>
    %9 = arith.addf %6, %8 : vector<8x128xf32>
    %c0_6 = arith.constant 0 : index
    %c0_7 = arith.constant 0 : index
    %10 = vector.load %arg12[%c0_6, %c0_7] : memref<8x128xf32, #tpu.memory_space<vmem>>, vector<8x128xf32>
    tpu.vector_store %arg12[%c0_6, %c0_7], %9 {strides = array<i32>} : memref<8x128xf32, #tpu.memory_space<vmem>>, vector<8x128xf32>,
    %c0_8 = arith.constant 0 : index
    %c0_9 = arith.constant 0 : index
    %c0_10 = arith.constant 0 : index
    %11 = vector.load %arg11[%c0_8, %c0_9, %c0_10] : memref<1x8x128xf32, #tpu.memory_space<vmem>>, vector<1x8x128xf32>
    %12 = vector.shape_cast %11 : vector<1x8x128xf32> to vector<8x128xf32>
    %13 = vector.shape_cast %9 : vector<8x128xf32> to vector<1x8x128xf32>
    tpu.vector_store %arg11[%c0_8, %c0_9, %c0_10], %13 {strides = array<i32>} : memref<1x8x128xf32, #tpu.memory_space<vmem>>, vector<1x8x128xf32>,
    %c0_11 = arith.constant 0 : index
    %c0_12 = arith.constant 0 : index
    %14 = vector.load %arg6[%c0_11, %c0_12] : memref<1x128xf32, #tpu.memory_space<vmem>>, vector<1x128xf32>
    %c0_13 = arith.constant 0 : index
    %c0_14 = arith.constant 0 : index
    %15 = vector.load %arg7[%c0_13, %c0_14] : memref<1x128xf32, #tpu.memory_space<vmem>>, vector<1x128xf32>
    %c0_15 = arith.constant 0 : index
    %c0_16 = arith.constant 0 : index
    %16 = vector.load %arg8[%c0_15, %c0_16] : memref<128x128xf32, #tpu.memory_space<vmem>>, vector<128x128xf32>
    %17 = tpu.iota {dimensions = array<i32: 1>} : vector<1x128xi32>
    %18 = tpu.iota {dimensions = array<i32: 1>} : vector<8x128xi32>
    %19 = tpu.iota {dimensions = array<i32: 0>} : vector<128x128xi32>
    %20 = tpu.iota {dimensions = array<i32: 0>} : vector<8x1xi32>
    %21 = tpu.iota {dimensions = array<i32: 1>} : vector<1x8xi32>
    %c0_17 = arith.constant 0 : index
    %c0_18 = arith.constant 0 : index
    %c0_19 = arith.constant 0 : index
    %22 = vector.load %arg3[%c0_17, %c0_18, %c0_19] : memref<1x8x2xi32, #tpu.memory_space<vmem>>, vector<1x8x2xi32>
    %23 = vector.shape_cast %22 : vector<1x8x2xi32> to vector<8x2xi32>
    %24 = vector.extract_strided_slice %23 {offsets = [0, 0], sizes = [8, 1], strides = [1, 1]} : vector<8x2xi32> to vector<8x1xi32>
    %25 = vector.extract_strided_slice %23 {offsets = [0, 1], sizes = [8, 1], strides = [1, 1]} : vector<8x2xi32> to vector<8x1xi32>
    %26 = vector.broadcast %24 : vector<8x1xi32> to vector<8x128xi32>
    %27 = arith.cmpi eq, %18, %26 : vector<8x128xi32>
    %28 = arith.extui %27 : vector<8x128xi1> to vector<8x128xi32>
    %29 = arith.sitofp %28 : vector<8x128xi32> to vector<8x128xf32>
    %30 = vector.broadcast %25 : vector<8x1xi32> to vector<8x128xi32>
    %31 = arith.cmpi eq, %18, %30 : vector<8x128xi32>
    %32 = arith.extui %31 : vector<8x128xi1> to vector<8x128xi32>
    %33 = arith.sitofp %32 : vector<8x128xi32> to vector<8x128xf32>
    %34 = vector.broadcast %1 : i32 to vector<8x1xi32>
    %35 = arith.cmpi slt, %20, %34 : vector<8x1xi32>
    %36 = arith.extui %35 : vector<8x1xi1> to vector<8x1xi32>
    %37 = arith.sitofp %36 : vector<8x1xi32> to vector<8x1xf32>
    %c1_i32_20 = arith.constant 1 : i32
    %38 = vector.broadcast %c1_i32_20 : i32 to vector<8x1xi32>
    %39 = arith.cmpi sge, %20, %38 : vector<8x1xi32>
    %40 = vector.broadcast %1 : i32 to vector<8x1xi32>
    %41 = arith.cmpi slt, %20, %40 : vector<8x1xi32>
    %42 = arith.andi %39, %41 : vector<8x1xi1>
    %43 = arith.extui %42 : vector<8x1xi1> to vector<8x1xi32>
    %44 = arith.sitofp %43 : vector<8x1xi32> to vector<8x1xf32>
    %45 = arith.mulf %9, %29 : vector<8x128xf32>
    %46 = vector.broadcast %37 : vector<8x1xf32> to vector<8x128xf32>
    %47 = arith.mulf %45, %46 : vector<8x128xf32>
    %48 = vector.shape_cast %47 : vector<8x128xf32> to vector<1x8x128xf32>
    %cst_21 = arith.constant dense<0.000000e+00> : vector<1xf32>
    %49 = vector.multi_reduction <add>, %48, %cst_21 [1, 2] : vector<1x8x128xf32> to vector<1xf32>
    %50 = vector.shape_cast %49 : vector<1xf32> to vector<1x1x1xf32>
    %51 = vector.extract %50[0, 0, 0] : f32 from vector<1x1x1xf32>
    %cst_22 = arith.constant dense<0.000000e+00> : vector<8x128xf32>
    %52 = tpu.matmul %33, %16, %cst_22 {dimension_numbers = #tpu.dot_dimension_numbers<[1], [0], [0], [1], [0, 0, 1, 1], [], []>} : vector<8x128xf32>, vector<128x128xf32>, vector<8x128xf32> -> vector<8x128xf32>
    %53 = arith.mulf %52, %29 : vector<8x128xf32>
    %54 = vector.broadcast %44 : vector<8x1xf32> to vector<8x128xf32>
    %55 = arith.mulf %53, %54 : vector<8x128xf32>
    %56 = vector.shape_cast %55 : vector<8x128xf32> to vector<1x8x128xf32>
    %cst_23 = arith.constant dense<0.000000e+00> : vector<1xf32>
    %57 = vector.multi_reduction <add>, %56, %cst_23 [1, 2] : vector<1x8x128xf32> to vector<1xf32>
    %58 = vector.shape_cast %57 : vector<1xf32> to vector<1x1x1xf32>
    %59 = vector.extract %58[0, 0, 0] : f32 from vector<1x1x1xf32>
    %60 = vector.extract_strided_slice %29 {offsets = [0, 0], sizes = [1, 128], strides = [1, 1]} : vector<8x128xf32> to vector<1x128xf32>
    %61 = arith.mulf %14, %60 : vector<1x128xf32>
    %62 = vector.shape_cast %61 : vector<1x128xf32> to vector<1x1x128xf32>
    %cst_24 = arith.constant dense<0.000000e+00> : vector<1xf32>
    %63 = vector.multi_reduction <add>, %62, %cst_24 [1, 2] : vector<1x1x128xf32> to vector<1xf32>
    %64 = vector.shape_cast %63 : vector<1xf32> to vector<1x1x1xf32>
    %65 = vector.extract %64[0, 0, 0] : f32 from vector<1x1x1xf32>
    %66 = vector.broadcast %2 : i32 to vector<8x1xi32>
    %67 = arith.cmpi eq, %20, %66 : vector<8x1xi32>
    %68 = arith.extui %67 : vector<8x1xi1> to vector<8x1xi32>
    %69 = arith.sitofp %68 : vector<8x1xi32> to vector<8x1xf32>
    %70 = vector.broadcast %69 : vector<8x1xf32> to vector<8x128xf32>
    %71 = arith.mulf %29, %70 : vector<8x128xf32>
    %cst_25 = arith.constant dense<0.000000e+00> : vector<128xf32>
    %72 = vector.multi_reduction <add>, %71, %cst_25 [0] : vector<8x128xf32> to vector<128xf32>
    %73 = vector.shape_cast %72 : vector<128xf32> to vector<1x128xf32>
    %74 = arith.mulf %15, %73 : vector<1x128xf32>
    %75 = vector.shape_cast %74 : vector<1x128xf32> to vector<1x1x128xf32>
    %cst_26 = arith.constant dense<0.000000e+00> : vector<1xf32>
    %76 = vector.multi_reduction <add>, %75, %cst_26 [1, 2] : vector<1x1x128xf32> to vector<1xf32>
    %77 = vector.shape_cast %76 : vector<1xf32> to vector<1x1x1xf32>
    %78 = vector.extract %77[0, 0, 0] : f32 from vector<1x1x1xf32>
    %79 = arith.addf %51, %59 : f32
    %80 = arith.addf %79, %65 : f32
    %81 = arith.addf %80, %78 : f32
    %82 = vector.extract_strided_slice %9 {offsets = [0, 0], sizes = [1, 128], strides = [1, 1]} : vector<8x128xf32> to vector<1x128xf32>
    %83 = arith.addf %14, %82 : vector<1x128xf32>
    %84 = tpu.transpose %83, [1, 0] : vector<1x128xf32> -> vector<128x1xf32>
    %c1_i32_27 = arith.constant 1 : i32
    %c7_i32 = arith.constant 7 : i32
    %85 = arith.addi %c1_i32_27, %c7_i32 : i32
    %c1_i32_28 = arith.constant 1 : i32
    %86:2 = scf.for %arg14 = %c1_i32_27 to %85 step %c1_i32_28 iter_args(%arg15 = %84, %arg16 = %84) -> (vector<128x1xf32>, vector<128x1xf32>)  : i32 {
      %141 = arith.index_cast %arg14 : i32 to index
      %c0_48 = arith.constant 0 : index
      %142 = vector.load %arg12[%141, %c0_48] : memref<8x128xf32, #tpu.memory_space<vmem>>, vector<1x128xf32>
      %143 = arith.cmpi slt, %arg14, %1 : i32
      %144 = vector.broadcast %arg15 : vector<128x1xf32> to vector<128x128xf32>
      %145 = arith.addf %144, %16 : vector<128x128xf32>
      %146 = vector.broadcast %142 : vector<1x128xf32> to vector<128x128xf32>
      %147 = arith.addf %145, %146 : vector<128x128xf32>
      %cst_49 = arith.constant dense<0xFF800000> : vector<128xf32>
      %148 = vector.multi_reduction <maximumf>, %147, %cst_49 [0] : vector<128x128xf32> to vector<128xf32>
      %149 = vector.shape_cast %148 : vector<128xf32> to vector<1x128xf32>
      %150 = vector.broadcast %149 : vector<1x128xf32> to vector<128x128xf32>
      %151 = arith.subf %147, %150 : vector<128x128xf32>
      %152 = math.exp %151 : vector<128x128xf32>
      %cst_50 = arith.constant dense<0.000000e+00> : vector<128xf32>
      %153 = vector.multi_reduction <add>, %152, %cst_50 [0] : vector<128x128xf32> to vector<128xf32>
      %154 = vector.shape_cast %153 : vector<128xf32> to vector<1x128xf32>
      %155 = math.log %154 : vector<1x128xf32>
      %156 = arith.addf %149, %155 : vector<1x128xf32>
      %157 = tpu.transpose %156, [1, 0] : vector<1x128xf32> -> vector<128x1xf32>
      %158 = arith.select %143, %157, %arg15 : vector<128x1xf32>
      %159 = vector.broadcast %arg16 : vector<128x1xf32> to vector<128x128xf32>
      %160 = arith.addf %159, %16 : vector<128x128xf32>
      %161 = vector.broadcast %142 : vector<1x128xf32> to vector<128x128xf32>
      %162 = arith.addf %160, %161 : vector<128x128xf32>
      %cst_51 = arith.constant dense<0xFF800000> : vector<128xf32>
      %163 = vector.multi_reduction <maximumf>, %162, %cst_51 [0] : vector<128x128xf32> to vector<128xf32>
      %164 = vector.shape_cast %163 : vector<128xf32> to vector<1x128xf32>
      %165 = vector.broadcast %164 : vector<1x128xf32> to vector<128x128xf32>
      %166 = arith.cmpf oeq, %162, %165 : vector<128x128xf32>
      %c128_i32_52 = arith.constant 128 : i32
      %167 = vector.broadcast %c128_i32_52 : i32 to vector<128x128xi32>
      %168 = arith.select %166, %19, %167 : vector<128x128xi1>, vector<128x128xi32>
      %cst_53 = arith.constant dense<2147483647> : vector<128xi32>
      %169 = vector.multi_reduction <minsi>, %168, %cst_53 [0] : vector<128x128xi32> to vector<128xi32>
      %170 = vector.shape_cast %169 : vector<128xi32> to vector<1x128xi32>
      %171 = arith.index_cast %arg14 : i32 to index
      %c0_54 = arith.constant 0 : index
      %172 = vector.load %arg13[%171, %c0_54] : memref<8x128xi32, #tpu.memory_space<vmem>>, vector<1x128xi32>
      tpu.vector_store %arg13[%171, %c0_54], %170 {strides = array<i32>} : memref<8x128xi32, #tpu.memory_space<vmem>>, vector<1x128xi32>,
      %173 = tpu.transpose %164, [1, 0] : vector<1x128xf32> -> vector<128x1xf32>
      %174 = arith.select %143, %173, %arg16 : vector<128x1xf32>
      scf.yield %158, %174 : vector<128x1xf32>, vector<128x1xf32>
    }
    %c7_i32_29 = arith.constant 7 : i32
    %87 = tpu.transpose %86#0, [1, 0] : vector<128x1xf32> -> vector<1x128xf32>
    %88 = arith.addf %87, %15 : vector<1x128xf32>
    %89 = vector.shape_cast %88 : vector<1x128xf32> to vector<1x1x128xf32>
    %cst_30 = arith.constant dense<0xFF800000> : vector<1xf32>
    %90 = vector.multi_reduction <maximumf>, %89, %cst_30 [1, 2] : vector<1x1x128xf32> to vector<1xf32>
    %91 = vector.shape_cast %90 : vector<1xf32> to vector<1x1x1xf32>
    %92 = vector.extract %91[0, 0, 0] : f32 from vector<1x1x1xf32>
    %93 = vector.broadcast %92 : f32 to vector<1x128xf32>
    %94 = arith.subf %88, %93 : vector<1x128xf32>
    %95 = math.exp %94 : vector<1x128xf32>
    %96 = vector.shape_cast %95 : vector<1x128xf32> to vector<1x1x128xf32>
    %cst_31 = arith.constant dense<0.000000e+00> : vector<1xf32>
    %97 = vector.multi_reduction <add>, %96, %cst_31 [1, 2] : vector<1x1x128xf32> to vector<1xf32>
    %98 = vector.shape_cast %97 : vector<1xf32> to vector<1x1x1xf32>
    %99 = vector.extract %98[0, 0, 0] : f32 from vector<1x1x1xf32>
    %100 = math.log %99 : f32
    %101 = arith.addf %92, %100 : f32
    %102 = tpu.transpose %86#1, [1, 0] : vector<128x1xf32> -> vector<1x128xf32>
    %103 = arith.addf %102, %15 : vector<1x128xf32>
    %104 = vector.shape_cast %103 : vector<1x128xf32> to vector<1x1x128xf32>
    %cst_32 = arith.constant dense<0xFF800000> : vector<1xf32>
    %105 = vector.multi_reduction <maximumf>, %104, %cst_32 [1, 2] : vector<1x1x128xf32> to vector<1xf32>
    %106 = vector.shape_cast %105 : vector<1xf32> to vector<1x1x1xf32>
    %107 = vector.extract %106[0, 0, 0] : f32 from vector<1x1x1xf32>
    %108 = vector.broadcast %107 : f32 to vector<1x128xf32>
    %109 = arith.cmpf oeq, %103, %108 : vector<1x128xf32>
    %c128_i32 = arith.constant 128 : i32
    %110 = vector.broadcast %c128_i32 : i32 to vector<1x128xi32>
    %111 = arith.select %109, %17, %110 : vector<1x128xi1>, vector<1x128xi32>
    %112 = vector.shape_cast %111 : vector<1x128xi32> to vector<1x1x128xi32>
    %cst_33 = arith.constant dense<2147483647> : vector<1xi32>
    %113 = vector.multi_reduction <minsi>, %112, %cst_33 [1, 2] : vector<1x1x128xi32> to vector<1xi32>
    %114 = vector.shape_cast %113 : vector<1xi32> to vector<1x1x1xi32>
    %115 = vector.extract %114[0, 0, 0] : i32 from vector<1x1x1xi32>
    %116 = tpu.iota {dimensions = array<i32: 1>} : vector<1x128xi32>
    %c0_i32 = arith.constant 0 : i32
    %117 = vector.broadcast %c0_i32 : i32 to vector<1x128xi32>
    %118 = arith.cmpi eq, %116, %117 : vector<1x128xi32>
    %cst_34 = arith.constant 0.000000e+00 : f32
    %119 = vector.broadcast %81 : f32 to vector<1x128xf32>
    %120 = vector.broadcast %cst_34 : f32 to vector<1x128xf32>
    %121 = arith.select %118, %119, %120 : vector<1x128xi1>, vector<1x128xf32>
    %c1_i32_35 = arith.constant 1 : i32
    %122 = vector.broadcast %c1_i32_35 : i32 to vector<1x128xi32>
    %123 = arith.cmpi eq, %116, %122 : vector<1x128xi32>
    %cst_36 = arith.constant 0.000000e+00 : f32
    %124 = vector.broadcast %101 : f32 to vector<1x128xf32>
    %125 = vector.broadcast %cst_36 : f32 to vector<1x128xf32>
    %126 = arith.select %123, %124, %125 : vector<1x128xi1>, vector<1x128xf32>
    %127 = arith.addf %121, %126 : vector<1x128xf32>
    %c0_37 = arith.constant 0 : index
    %c0_38 = arith.constant 0 : index
    %c0_39 = arith.constant 0 : index
    %128 = vector.load %arg10[%c0_37, %c0_38, %c0_39] : memref<1x1x128xf32, #tpu.memory_space<vmem>>, vector<1x1x128xf32>
    %129 = vector.shape_cast %128 : vector<1x1x128xf32> to vector<1x128xf32>
    %130 = vector.shape_cast %127 : vector<1x128xf32> to vector<1x1x128xf32>
    tpu.vector_store %arg10[%c0_37, %c0_38, %c0_39], %130 {strides = array<i32>} : memref<1x1x128xf32, #tpu.memory_space<vmem>>, vector<1x1x128xf32>,
    %131 = vector.broadcast %2 : i32 to vector<1x8xi32>
    %132 = arith.cmpi eq, %21, %131 : vector<1x8xi32>
    %c0_i32_40 = arith.constant 0 : i32
    %133 = vector.broadcast %115 : i32 to vector<1x8xi32>
    %134 = vector.broadcast %c0_i32_40 : i32 to vector<1x8xi32>
    %135 = arith.select %132, %133, %134 : vector<1x8xi1>, vector<1x8xi32>
    %c0_i32_41 = arith.constant 0 : i32
    %c7_i32_42 = arith.constant 7 : i32
    %136 = arith.addi %c0_i32_41, %c7_i32_42 : i32
    %c1_i32_43 = arith.constant 1 : i32
    %137:2 = scf.for %arg14 = %c0_i32_41 to %136 step %c1_i32_43 iter_args(%arg15 = %115, %arg16 = %135) -> (i32, vector<1x8xi32>)  : i32 {
      %c6_i32 = arith.constant 6 : i32
      %141 = arith.subi %c6_i32, %arg14 : i32
      %c1_i32_48 = arith.constant 1 : i32
      %142 = arith.addi %141, %c1_i32_48 : i32
      %143 = arith.index_cast %142 : i32 to index
      %c0_49 = arith.constant 0 : index
      %144 = vector.load %arg13[%143, %c0_49] : memref<8x128xi32, #tpu.memory_space<vmem>>, vector<1x128xi32>
      %145 = vector.broadcast %arg15 : i32 to vector<1x128xi32>
      %146 = arith.cmpi eq, %17, %145 : vector<1x128xi32>
      %c0_i32_50 = arith.constant 0 : i32
      %147 = vector.broadcast %c0_i32_50 : i32 to vector<1x128xi32>
      %148 = arith.select %146, %144, %147 : vector<1x128xi1>, vector<1x128xi32>
      %149 = vector.shape_cast %148 : vector<1x128xi32> to vector<1x1x128xi32>
      %cst_51 = arith.constant dense<0> : vector<1xi32>
      %150 = vector.multi_reduction <add>, %149, %cst_51 [1, 2] : vector<1x1x128xi32> to vector<1xi32>
      %151 = vector.shape_cast %150 : vector<1xi32> to vector<1x1x1xi32>
      %152 = vector.extract %151[0, 0, 0] : i32 from vector<1x1x1xi32>
      %153 = arith.cmpi slt, %141, %2 : i32
      %154 = arith.select %153, %152, %arg15 : i32
      %155 = vector.broadcast %141 : i32 to vector<1x8xi32>
      %156 = arith.cmpi eq, %21, %155 : vector<1x8xi32>
      %157 = vector.broadcast %153 : i1 to vector<1x8xi1>
      %158 = arith.andi %157, %156 : vector<1x8xi1>
      %159 = vector.broadcast %154 : i32 to vector<1x8xi32>
      %160 = arith.select %158, %159, %arg16 : vector<1x8xi1>, vector<1x8xi32>
      scf.yield %154, %160 : i32, vector<1x8xi32>
    }
    %c7_i32_44 = arith.constant 7 : i32
    %c0_45 = arith.constant 0 : index
    %c0_46 = arith.constant 0 : index
    %c0_47 = arith.constant 0 : index
    %138 = vector.load %arg9[%c0_45, %c0_46, %c0_47] : memref<1x1x8xi32, #tpu.memory_space<vmem>>, vector<1x1x8xi32>
    %139 = vector.shape_cast %138 : vector<1x1x8xi32> to vector<1x8xi32>
    %140 = vector.shape_cast %137#1 : vector<1x8xi32> to vector<1x1x8xi32>
    tpu.vector_store %arg9[%c0_45, %c0_46, %c0_47], %140 {strides = array<i32>} : memref<1x1x8xi32, #tpu.memory_space<vmem>>, vector<1x1x8xi32>,
    return
  }
  func.func @transform_0(%arg0: i32, %arg1: memref<2xi32, #tpu.memory_space<smem>>) -> (i32, i32, i32) {
    %c0_i32 = arith.constant 0 : i32
    %c0_i32_0 = arith.constant 0 : i32
    %c0_i32_1 = arith.constant 0 : i32
    return %arg0, %c0_i32, %c0_i32_0 : i32, i32, i32
  }
  func.func @transform_1(%arg0: i32, %arg1: memref<2xi32, #tpu.memory_space<smem>>) -> (i32, i32, i32) {
    %c0_i32 = arith.constant 0 : i32
    %c0_i32_0 = arith.constant 0 : i32
    %c0_i32_1 = arith.constant 0 : i32
    return %arg0, %c0_i32, %c0_i32_0 : i32, i32, i32
  }
  func.func @transform_2(%arg0: i32, %arg1: memref<2xi32, #tpu.memory_space<smem>>) -> (i32, i32) {
    %c0_i32 = arith.constant 0 : i32
    %c0_i32_0 = arith.constant 0 : i32
    %c0_i32_1 = arith.constant 0 : i32
    return %c0_i32, %c0_i32_0 : i32, i32
  }
  func.func @transform_3(%arg0: i32, %arg1: memref<2xi32, #tpu.memory_space<smem>>) -> (i32, i32) {
    %c0_i32 = arith.constant 0 : i32
    %c0_i32_0 = arith.constant 0 : i32
    %c0_i32_1 = arith.constant 0 : i32
    return %c0_i32, %c0_i32_0 : i32, i32
  }
  func.func @transform_4(%arg0: i32, %arg1: memref<2xi32, #tpu.memory_space<smem>>) -> (i32, i32) {
    %c0_i32 = arith.constant 0 : i32
    %c0_i32_0 = arith.constant 0 : i32
    %c0_i32_1 = arith.constant 0 : i32
    return %c0_i32, %c0_i32_0 : i32, i32
  }
  func.func @transform_5(%arg0: i32, %arg1: memref<2xi32, #tpu.memory_space<smem>>) -> (i32, i32) {
    %c0_i32 = arith.constant 0 : i32
    %c0_i32_0 = arith.constant 0 : i32
    %c0_i32_1 = arith.constant 0 : i32
    return %c0_i32, %c0_i32_0 : i32, i32
  }
  func.func @transform_6(%arg0: i32, %arg1: memref<2xi32, #tpu.memory_space<smem>>) -> (i32, i32) {
    %c0_i32 = arith.constant 0 : i32
    %c0_i32_0 = arith.constant 0 : i32
    %c0_i32_1 = arith.constant 0 : i32
    return %c0_i32, %c0_i32_0 : i32, i32
  }
  func.func @transform_7(%arg0: i32, %arg1: memref<2xi32, #tpu.memory_space<smem>>) -> (i32, i32, i32) {
    %c0_i32 = arith.constant 0 : i32
    %c0_i32_0 = arith.constant 0 : i32
    %c0_i32_1 = arith.constant 0 : i32
    return %arg0, %c0_i32, %c0_i32_0 : i32, i32, i32
  }
  func.func @transform_8(%arg0: i32, %arg1: memref<2xi32, #tpu.memory_space<smem>>) -> (i32, i32, i32) {
    %c0_i32 = arith.constant 0 : i32
    %c0_i32_0 = arith.constant 0 : i32
    %c0_i32_1 = arith.constant 0 : i32
    return %arg0, %c0_i32, %c0_i32_0 : i32, i32, i32
  }
  func.func @transform_9(%arg0: i32, %arg1: memref<2xi32, #tpu.memory_space<smem>>) -> (i32, i32, i32) {
    %c0_i32 = arith.constant 0 : i32
    %c0_i32_0 = arith.constant 0 : i32
    %c0_i32_1 = arith.constant 0 : i32
    return %arg0, %c0_i32, %c0_i32_0 : i32, i32, i32
  }
}

</mosaic_0001>

<llo_original>
// kernel: tpu_custom_call.1
$region0: #{tpu_custom_call.1}
  #allocation0 [shape = 'u32[]', space=smem, size = 0x4, offset = 0x4, fixed_abs, tag = 'smem constant byte address 0x4 - core index']
  #allocation1 [shape = 'u32[72,128]{1,0:T(1,128)}', space=vmem, size = 0x9000, scoped, tag = 'internal scratch']
  #allocation2 [shape = 'f32[8,128]{1,0:T(8,128)}', space=vmem, size = 0x1000, scoped, tag = 'scratch operand']
  #allocation3 [shape = 's32[8,128]{1,0:T(8,128)}', space=vmem, size = 0x1000, scoped, tag = 'scratch operand']
  #allocation4 [shape = 's32[1]{0}', space=sflag, size = 0x4, scoped, tag = 'scoped memory for tpu_custom_call.1']
  #allocation5 [shape = 'u8[512]{0}', space=smem, size = 0x200, scoped, tag = 'prefetched SMEM operand 0']
  %s0 = inlined_call_operand.vmem [shape: s32[2], index: 0, kind: input, shape index: {}]
  %s1 = inlined_call_operand.vmem [shape: f32[2,8,32], index: 1, kind: input, shape index: {}]
  %s2 = inlined_call_operand.vmem [shape: s32[2,8,2], index: 2, kind: input, shape index: {}]
  %s3 = inlined_call_operand.hbm [shape: f32[32,128], index: 3, kind: input, shape index: {}]
  %s4 = inlined_call_operand.vmem [shape: f32[1,128], index: 4, kind: input, shape index: {}]
  %s5 = inlined_call_operand.vmem [shape: f32[1,128], index: 5, kind: input, shape index: {}]
  %s6 = inlined_call_operand.vmem [shape: f32[1,128], index: 6, kind: input, shape index: {}]
  %s7 = inlined_call_operand.hbm [shape: f32[128,128], index: 7, kind: input, shape index: {}]
  %s8 = inlined_call_operand.hbm [shape: s32[2,1,8], index: 8, kind: output, shape index: {0}]
  %s9 = inlined_call_operand.hbm [shape: f32[2,1,128], index: 9, kind: output, shape index: {1}]
  %s10 = inlined_call_operand.hbm [shape: f32[2,8,128], index: 10, kind: output, shape index: {2}]
  %11 = xla_tuple %s8, %s9, %s10
  %s12 = sld [smem:[#allocation0]]
  $region99: #{tpu_custom_call.1} parent=0
    _
  %s14 = ssub.s32 1, %s12
  %s15 = scalar_select 0, %s14, %s12
  %s17 = sshll.u32 %s0, 4
  %s18 = int_to_ptr.vmem [resolvable:$true] %s17
  %20 = dma.vmem_to_smem %s18, 16, [#allocation5], [#allocation4]
  %22 = dma.done [#allocation4], 16
  %23 = sfence
  $region1: #{tpu_custom_call.1} parent=0
    #allocation6 [shape = 'u8[16384]{0}', space=vmem, size = 0x4000, scoped, tag = 'input window, operand 3, single buffered']
    #allocation7 [shape = 's32[2]{0}', space=sflag, size = 0x8, scoped, tag = 'scoped memory for tpu_custom_call.1']
    #allocation8 [shape = 's32[2]{0}', space=sflag, size = 0x8, scoped, tag = 'scoped memory for tpu_custom_call.1']
    #allocation9 [shape = 'u8[65536]{0}', space=vmem, size = 0x10000, scoped, tag = 'input window, operand 7, single buffered']
    #allocation10 [shape = 's32[1]{0}', space=sflag, size = 0x4, scoped, tag = 'scoped memory for tpu_custom_call.1']
    #allocation11 [shape = 'u8[1024]{0}', space=vmem, size = 0x400, scoped, tag = 'output window, operand 0']
    #allocation12 [shape = 'u8[1024]{0}', space=vmem, size = 0x400, scoped, tag = 'output window, operand 1']
    #allocation13 [shape = 's32[2]{0}', space=sflag, size = 0x8, scoped, tag = 'scoped memory for tpu_custom_call.1']
    #allocation14 [shape = 'u8[8192]{0}', space=vmem, size = 0x2000, scoped, tag = 'output window, operand 2']
    %24 = vsyncpa [#allocation7], 0
    %25 = vsyncpa [#allocation10], 0
    %26 = vsyncpa [#allocation8], 0
    %s27 = scalar_lea.sflag [#allocation8], 1
    %28 = vsyncpa %s27, 0
    %29 = vsyncpa [#allocation13], 0
    %s30 = scalar_lea.sflag [#allocation13], 1
    %31 = vsyncpa %s30, 0
    loop: start=0, step=1, limit=4
    $region2: #{tpu_custom_call.1} parent=1 // loop_pre_header
      _
    $region3: #{tpu_custom_call.1} parent=1 // loop_header
      %s33 = sphi 0, %s37
      %p34 = scmp.ge.s32.totalorder %s33, 4
      %s43 = sphi 0, %s45
      %s46 = sphi 0, %s43
      %s47 = sphi 0, %s46
      %s63 = sphi 0, %s47
      %s69 = sphi 0, %s71
      %s72 = sphi 0, %s69
      %s73 = sphi 0, %s72
      %s89 = sphi 0, %s73
      %s93 = sphi 0, %s93
      %s95 = sphi 0, %s93
      %s96 = sphi 0, %s95
      %s110 = sphi 0, %s96
      %s114 = sphi 0, %s114
      %s116 = sphi 0, %s114
      %s117 = sphi 0, %s116
      %s131 = sphi 0, %s117
      %s135 = sphi 0, %s135
      %s137 = sphi 0, %s135
      %s138 = sphi 0, %s137
      %s152 = sphi 0, %s138
      %s156 = sphi 0, %s156
      %s158 = sphi 0, %s156
      %s159 = sphi 0, %s158
      %s173 = sphi 0, %s159
      %s177 = sphi 0, %s177
      %s179 = sphi 0, %s177
      %s180 = sphi 0, %s179
      %s194 = sphi 0, %s180
      %s200 = sphi 0, %s202
      %s203 = sphi 0, %s200
      %s204 = sphi 0, %s203
      %s220 = sphi 0, %s204
      %s226 = sphi 0, %s228
      %s229 = sphi 0, %s226
      %s230 = sphi 0, %s229
      %s246 = sphi 0, %s230
      %s252 = sphi 0, %s254
      %s255 = sphi 0, %s252
      %s256 = sphi 0, %s255
      %s272 = sphi 0, %s256
    $region4: #{tpu_custom_call.1} parent=1 // loop_header_branch
      %36 = sbr.rel (%p34) target = $region8
    $region5: #{tpu_custom_call.1} parent=1 // loop_body
      %s38 = ssub.s32 %s33, 1
      %s39 = ssub.s32 %s33, 2
      %s40 = sadd.s32 %s33, 1
      %s41 = ssub.s32 %s33, %s40
      %p42 = scmp.eq.s32.totalorder %s41, 0
      %s44 = sadd.s32 %s43, 1
      %s45 = scalar_select %p42, %s43, %s44
      %p48 = pneg %p42
      %p49 = scmp.eq.s32.totalorder %s33, 1
      %p50 = por %p48, %p49
      %p51 = scmp.ne.s32.totalorder %s43, %s46
      %p52 = scmp.eq.s32.totalorder %s33, 0
      %p53 = por %p51, %p52
      %p54 = scmp.ne.s32.totalorder %s43, %s46
      %p55 = scmp.eq.s32.totalorder %s38, 1
      %p56 = por %p54, %p55
      %p57 = scmp.ne.s32.totalorder %s46, %s47
      %p58 = scmp.eq.s32.totalorder %s38, 0
      %p59 = por %p57, %p58
      %p60 = scmp.ne.s32.totalorder %s46, %s47
      %p61 = scmp.eq.s32.totalorder %s39, 1
      %p62 = por %p60, %p61
      %p64 = scmp.ne.s32.totalorder %s47, %s63
      %p65 = scmp.eq.s32.totalorder %s39, 0
      %p66 = por %p64, %p65
      %s67 = ssub.s32 %s33, %s40
      %p68 = scmp.eq.s32.totalorder %s67, 0
      %s70 = sadd.s32 %s69, 1
      %s71 = scalar_select %p68, %s69, %s70
      %p74 = pneg %p68
      %p75 = scmp.eq.s32.totalorder %s33, 1
      %p76 = por %p74, %p75
      %p77 = scmp.ne.s32.totalorder %s69, %s72
      %p78 = scmp.eq.s32.totalorder %s33, 0
      %p79 = por %p77, %p78
      %p80 = scmp.ne.s32.totalorder %s69, %s72
      %p81 = scmp.eq.s32.totalorder %s38, 1
      %p82 = por %p80, %p81
      %p83 = scmp.ne.s32.totalorder %s72, %s73
      %p84 = scmp.eq.s32.totalorder %s38, 0
      %p85 = por %p83, %p84
      %p86 = scmp.ne.s32.totalorder %s72, %s73
      %p87 = scmp.eq.s32.totalorder %s39, 1
      %p88 = por %p86, %p87
      %p90 = scmp.ne.s32.totalorder %s73, %s89
      %p91 = scmp.eq.s32.totalorder %s39, 0
      %p92 = por %p90, %p91
      %s94 = sadd.s32 %s93, 1
      %p97 = scmp.eq.s32.totalorder %s33, 1
      %p98 = scmp.ne.s32.totalorder %s93, %s95
      %p99 = scmp.eq.s32.totalorder %s33, 0
      %p100 = por %p98, %p99
      %p101 = scmp.ne.s32.totalorder %s93, %s95
      %p102 = scmp.eq.s32.totalorder %s38, 1
      %p103 = por %p101, %p102
      %p104 = scmp.ne.s32.totalorder %s95, %s96
      %p105 = scmp.eq.s32.totalorder %s38, 0
      %p106 = por %p104, %p105
      %p107 = scmp.ne.s32.totalorder %s95, %s96
      %p108 = scmp.eq.s32.totalorder %s39, 1
      %p109 = por %p107, %p108
      %p111 = scmp.ne.s32.totalorder %s96, %s110
      %p112 = scmp.eq.s32.totalorder %s39, 0
      %p113 = por %p111, %p112
      %s115 = sadd.s32 %s114, 1
      %p118 = scmp.eq.s32.totalorder %s33, 1
      %p119 = scmp.ne.s32.totalorder %s114, %s116
      %p120 = scmp.eq.s32.totalorder %s33, 0
      %p121 = por %p119, %p120
      %p122 = scmp.ne.s32.totalorder %s114, %s116
      %p123 = scmp.eq.s32.totalorder %s38, 1
      %p124 = por %p122, %p123
      %p125 = scmp.ne.s32.totalorder %s116, %s117
      %p126 = scmp.eq.s32.totalorder %s38, 0
      %p127 = por %p125, %p126
      %p128 = scmp.ne.s32.totalorder %s116, %s117
      %p129 = scmp.eq.s32.totalorder %s39, 1
      %p130 = por %p128, %p129
      %p132 = scmp.ne.s32.totalorder %s117, %s131
      %p133 = scmp.eq.s32.totalorder %s39, 0
      %p134 = por %p132, %p133
      %s136 = sadd.s32 %s135, 1
      %p139 = scmp.eq.s32.totalorder %s33, 1
      %p140 = scmp.ne.s32.totalorder %s135, %s137
      %p141 = scmp.eq.s32.totalorder %s33, 0
      %p142 = por %p140, %p141
      %p143 = scmp.ne.s32.totalorder %s135, %s137
      %p144 = scmp.eq.s32.totalorder %s38, 1
      %p145 = por %p143, %p144
      %p146 = scmp.ne.s32.totalorder %s137, %s138
      %p147 = scmp.eq.s32.totalorder %s38, 0
      %p148 = por %p146, %p147
      %p149 = scmp.ne.s32.totalorder %s137, %s138
      %p150 = scmp.eq.s32.totalorder %s39, 1
      %p151 = por %p149, %p150
      %p153 = scmp.ne.s32.totalorder %s138, %s152
      %p154 = scmp.eq.s32.totalorder %s39, 0
      %p155 = por %p153, %p154
      %s157 = sadd.s32 %s156, 1
      %p160 = scmp.eq.s32.totalorder %s33, 1
      %p161 = scmp.ne.s32.totalorder %s156, %s158
      %p162 = scmp.eq.s32.totalorder %s33, 0
      %p163 = por %p161, %p162
      %p164 = scmp.ne.s32.totalorder %s156, %s158
      %p165 = scmp.eq.s32.totalorder %s38, 1
      %p166 = por %p164, %p165
      %p167 = scmp.ne.s32.totalorder %s158, %s159
      %p168 = scmp.eq.s32.totalorder %s38, 0
      %p169 = por %p167, %p168
      %p170 = scmp.ne.s32.totalorder %s158, %s159
      %p171 = scmp.eq.s32.totalorder %s39, 1
      %p172 = por %p170, %p171
      %p174 = scmp.ne.s32.totalorder %s159, %s173
      %p175 = scmp.eq.s32.totalorder %s39, 0
      %p176 = por %p174, %p175
      %s178 = sadd.s32 %s177, 1
      %p181 = scmp.eq.s32.totalorder %s33, 1
      %p182 = scmp.ne.s32.totalorder %s177, %s179
      %p183 = scmp.eq.s32.totalorder %s33, 0
      %p184 = por %p182, %p183
      %p185 = scmp.ne.s32.totalorder %s177, %s179
      %p186 = scmp.eq.s32.totalorder %s38, 1
      %p187 = por %p185, %p186
      %p188 = scmp.ne.s32.totalorder %s179, %s180
      %p189 = scmp.eq.s32.totalorder %s38, 0
      %p190 = por %p188, %p189
      %p191 = scmp.ne.s32.totalorder %s179, %s180
      %p192 = scmp.eq.s32.totalorder %s39, 1
      %p193 = por %p191, %p192
      %p195 = scmp.ne.s32.totalorder %s180, %s194
      %p196 = scmp.eq.s32.totalorder %s39, 0
      %p197 = por %p195, %p196
      %s198 = ssub.s32 %s33, %s40
      %p199 = scmp.eq.s32.totalorder %s198, 0
      %s201 = sadd.s32 %s200, 1
      %s202 = scalar_select %p199, %s200, %s201
      %p205 = pneg %p199
      %p206 = scmp.eq.s32.totalorder %s33, 1
      %p207 = por %p205, %p206
      %p208 = scmp.ne.s32.totalorder %s200, %s203
      %p209 = scmp.eq.s32.totalorder %s33, 0
      %p210 = por %p208, %p209
      %p211 = scmp.ne.s32.totalorder %s200, %s203
      %p212 = scmp.eq.s32.totalorder %s38, 1
      %p213 = por %p211, %p212
      %p214 = scmp.ne.s32.totalorder %s203, %s204
      %p215 = scmp.eq.s32.totalorder %s38, 0
      %p216 = por %p214, %p215
      %p217 = scmp.ne.s32.totalorder %s203, %s204
      %p218 = scmp.eq.s32.totalorder %s39, 1
      %p219 = por %p217, %p218
      %p221 = scmp.ne.s32.totalorder %s204, %s220
      %p222 = scmp.eq.s32.totalorder %s39, 0
      %p223 = por %p221, %p222
      %s224 = ssub.s32 %s33, %s40
      %p225 = scmp.eq.s32.totalorder %s224, 0
      %s227 = sadd.s32 %s226, 1
      %s228 = scalar_select %p225, %s226, %s227
      %p231 = pneg %p225
      %p232 = scmp.eq.s32.totalorder %s33, 1
      %p233 = por %p231, %p232
      %p234 = scmp.ne.s32.totalorder %s226, %s229
      %p235 = scmp.eq.s32.totalorder %s33, 0
      %p236 = por %p234, %p235
      %p237 = scmp.ne.s32.totalorder %s226, %s229
      %p238 = scmp.eq.s32.totalorder %s38, 1
      %p239 = por %p237, %p238
      %p240 = scmp.ne.s32.totalorder %s229, %s230
      %p241 = scmp.eq.s32.totalorder %s38, 0
      %p242 = por %p240, %p241
      %p243 = scmp.ne.s32.totalorder %s229, %s230
      %p244 = scmp.eq.s32.totalorder %s39, 1
      %p245 = por %p243, %p244
      %p247 = scmp.ne.s32.totalorder %s230, %s246
      %p248 = scmp.eq.s32.totalorder %s39, 0
      %p249 = por %p247, %p248
      %s250 = ssub.s32 %s33, %s40
      %p251 = scmp.eq.s32.totalorder %s250, 0
      %s253 = sadd.s32 %s252, 1
      %s254 = scalar_select %p251, %s252, %s253
      %p257 = pneg %p251
      %p258 = scmp.eq.s32.totalorder %s33, 1
      %p259 = por %p257, %p258
      %p260 = scmp.ne.s32.totalorder %s252, %s255
      %p261 = scmp.eq.s32.totalorder %s33, 0
      %p262 = por %p260, %p261
      %p263 = scmp.ne.s32.totalorder %s252, %s255
      %p264 = scmp.eq.s32.totalorder %s38, 1
      %p265 = por %p263, %p264
      %p266 = scmp.ne.s32.totalorder %s255, %s256
      %p267 = scmp.eq.s32.totalorder %s38, 0
      %p268 = por %p266, %p267
      %p269 = scmp.ne.s32.totalorder %s255, %s256
      %p270 = scmp.eq.s32.totalorder %s39, 1
      %p271 = por %p269, %p270
      %p273 = scmp.ne.s32.totalorder %s256, %s272
      %p274 = scmp.eq.s32.totalorder %s39, 0
      %p275 = por %p273, %p274
      %p276 = scmp.le.s32.totalorder 1, %s33
      %p277 = scmp.lt.s32.totalorder %s33, 3
      %p278 = pnand %p276, %p277
      %p279 = pneg %p278
      // Predicated region
      $region9: #{tpu_custom_call.1} parent=5 // pred_check
        _
      $region10: #{tpu_custom_call.1} parent=5 // pred_check_branch
        %281 = sbr.rel (%p278) target = $region12
      $region11: #{tpu_custom_call.1} parent=5 // pred_region
        %s282 = ssub.s32 %s33, 1
        // Predicated region
        $region13: #{tpu_custom_call.1} parent=11 // pred_check
          %p283 = pneg %p106
        $region14: #{tpu_custom_call.1} parent=11 // pred_check_branch
          %285 = sbr.rel (%p283) target = $region16
        $region15: #{tpu_custom_call.1} parent=11 // pred_region
          %287 = vsyncadd [#allocation7], 0
          %s288 = sshll.u32 %s3, 4
          %s289 = int_to_ptr.hbm [resolvable:$true] %s288
          %s290 = sshll.u32 [#allocation6], 4
          %s291 = int_to_ptr.vmem [resolvable:$true] %s290
          %296 = dma.hbm_to_vmem [thread:$0]  %s289, 512, %s291, [#allocation7], 128, 128, 8
        $region16: #{tpu_custom_call.1} parent=11 // pred_fallthru
          _
        // Predicated region
        $region17: #{tpu_custom_call.1} parent=11 // pred_check
          %p297 = pneg %p127
        $region18: #{tpu_custom_call.1} parent=11 // pred_check_branch
          %299 = sbr.rel (%p297) target = $region20
        $region19: #{tpu_custom_call.1} parent=11 // pred_region
          _
        $region20: #{tpu_custom_call.1} parent=11 // pred_fallthru
          _
        // Predicated region
        $region21: #{tpu_custom_call.1} parent=11 // pred_check
          %p300 = pneg %p148
        $region22: #{tpu_custom_call.1} parent=11 // pred_check_branch
          %302 = sbr.rel (%p300) target = $region24
        $region23: #{tpu_custom_call.1} parent=11 // pred_region
          _
        $region24: #{tpu_custom_call.1} parent=11 // pred_fallthru
          _
        // Predicated region
        $region25: #{tpu_custom_call.1} parent=11 // pred_check
          %p303 = pneg %p169
        $region26: #{tpu_custom_call.1} parent=11 // pred_check_branch
          %305 = sbr.rel (%p303) target = $region28
        $region27: #{tpu_custom_call.1} parent=11 // pred_region
          _
        $region28: #{tpu_custom_call.1} parent=11 // pred_fallthru
          _
        // Predicated region
        $region29: #{tpu_custom_call.1} parent=11 // pred_check
          %p306 = pneg %p190
        $region30: #{tpu_custom_call.1} parent=11 // pred_check_branch
          %308 = sbr.rel (%p306) target = $region32
        $region31: #{tpu_custom_call.1} parent=11 // pred_region
          %310 = vsyncadd [#allocation10], 0
          %s311 = sshll.u32 %s7, 4
          %s312 = int_to_ptr.hbm [resolvable:$true] %s311
          %s313 = sshll.u32 [#allocation9], 4
          %s314 = int_to_ptr.vmem [resolvable:$true] %s313
          %319 = dma.hbm_to_vmem [thread:$0]  %s312, 2048, %s314, [#allocation10], 128, 128, 8
        $region32: #{tpu_custom_call.1} parent=11 // pred_fallthru
          _
      $region12: #{tpu_custom_call.1} parent=5 // pred_fallthru
        _
      %p320 = scmp.lt.s32.totalorder %s33, 2
      // Predicated region
      $region33: #{tpu_custom_call.1} parent=5 // pred_check
        %p321 = pneg %p320
      $region34: #{tpu_custom_call.1} parent=5 // pred_check_branch
        %323 = sbr.rel (%p321) target = $region36
      $region35: #{tpu_custom_call.1} parent=5 // pred_region
        // Predicated region
        $region37: #{tpu_custom_call.1} parent=35 // pred_check
          %p324 = pneg %p53
        $region38: #{tpu_custom_call.1} parent=35 // pred_check_branch
          %326 = sbr.rel (%p324) target = $region40
        $region39: #{tpu_custom_call.1} parent=35 // pred_region
          %p327 = scmp.lt.s32.totalorder %s33, 1
          %s328 = scalar_select %p327, %s33, 1
          %s329 = smul.addr %s328, 8
          %s330 = scalar_lea.vmem %s1, %s329
        $region40: #{tpu_custom_call.1} parent=35 // pred_fallthru
          _
        // Predicated region
        $region41: #{tpu_custom_call.1} parent=35 // pred_check
          %p331 = pneg %p79
        $region42: #{tpu_custom_call.1} parent=35 // pred_check_branch
          %333 = sbr.rel (%p331) target = $region44
        $region43: #{tpu_custom_call.1} parent=35 // pred_region
          %p334 = scmp.lt.s32.totalorder %s33, 1
          %s335 = scalar_select %p334, %s33, 1
          %s336 = smul.addr %s335, 8
          %s337 = scalar_lea.vmem %s2, %s336
        $region44: #{tpu_custom_call.1} parent=35 // pred_fallthru
          _
      $region36: #{tpu_custom_call.1} parent=5 // pred_fallthru
        _
      %p338 = scmp.le.s32.totalorder 1, %s33
      %p339 = scmp.lt.s32.totalorder %s33, 3
      %p340 = pnand %p338, %p339
      %p341 = pneg %p340
      // Predicated region
      $region45: #{tpu_custom_call.1} parent=5 // pred_check
        _
      $region46: #{tpu_custom_call.1} parent=5 // pred_check_branch
        %343 = sbr.rel (%p340) target = $region48
      $region47: #{tpu_custom_call.1} parent=5 // pred_region
        %s344 = ssub.s32 %s33, 1
        // Predicated region
        $region49: #{tpu_custom_call.1} parent=47 // pred_check
          %p345 = pneg %p106
        $region50: #{tpu_custom_call.1} parent=47 // pred_check_branch
          %347 = sbr.rel (%p345) target = $region52
        $region51: #{tpu_custom_call.1} parent=47 // pred_region
          %349 = dma.done [#allocation7], 512
        $region52: #{tpu_custom_call.1} parent=47 // pred_fallthru
          _
        // Predicated region
        $region53: #{tpu_custom_call.1} parent=47 // pred_check
          %p350 = pneg %p190
        $region54: #{tpu_custom_call.1} parent=47 // pred_check_branch
          %352 = sbr.rel (%p350) target = $region56
        $region55: #{tpu_custom_call.1} parent=47 // pred_region
          %354 = dma.done [#allocation10], 2048
        $region56: #{tpu_custom_call.1} parent=47 // pred_fallthru
          _
        %p355 = scmp.lt.s32.totalorder %s38, 1
        %s356 = scalar_select %p355, %s38, 1
        %s357 = smul.addr %s356, 8
        %s358 = scalar_lea.vmem %s1, %s357
        %p359 = pneg %p59
        %p360 = pneg %p56
        %p361 = scmp.lt.s32.totalorder %s38, 1
        %s362 = scalar_select %p361, %s38, 1
        %s363 = smul.addr %s362, 8
        %s364 = scalar_lea.vmem %s2, %s363
        %p365 = pneg %p85
        %p366 = pneg %p82
        %p367 = pneg %p106
        %p368 = pneg %p103
        %p369 = pneg %p127
        %p370 = pneg %p124
        %p371 = pneg %p148
        %p372 = pneg %p145
        %p373 = pneg %p169
        %p374 = pneg %p166
        %p375 = pneg %p190
        %p376 = pneg %p187
        %p377 = pneg %p216
        %p378 = pneg %p213
        %s379 = sand.u32 %s203, 1
        %s380 = scalar_lea.sflag [#allocation8], %s379
        %s381 = sand.u32 %s203, 1
        %s382 = scalar_lea.vmem [#allocation11], %s381
        %p383 = pneg %p242
        %p384 = pneg %p239
        %s385 = sand.u32 %s38, 1
        %s386 = scalar_lea.sflag [#allocation13], %s385
        %s387 = sand.u32 %s229, 1
        %s388 = scalar_lea.vmem [#allocation12], %s387
        %p389 = pneg %p268
        %p390 = pneg %p265
        %s391 = sand.u32 %s38, 1
        %s392 = scalar_lea.sflag [#allocation13], %s391
        %s393 = sand.u32 %s255, 1
        %s394 = smul.addr %s393, 8
        %s395 = scalar_lea.vmem [#allocation14], %s394
        %p396 = scmp.lt.s32.totalorder %s38, 1
        %s397 = scalar_select %p396, %s38, 1
        %s398 = smul.addr %s397, 8
        %s399 = scalar_lea.vmem %s1, %s398
        %p400 = scmp.lt.s32.totalorder %s38, 1
        %s401 = scalar_select %p400, %s38, 1
        %s402 = smul.addr %s401, 8
        %s403 = scalar_lea.vmem %s2, %s402
        %s404 = sld [smem:[#allocation5 + %s38]]
        %s405 = ssub.s32 %s404, 1
        %v406 = vld [vmem:[%s399] sm:$0xff]
        %v407 = vld [vmem:[#allocation6] sm:$0xff]
        %v408 = vld [vmem:[#allocation6 + $0x8] sm:$0xff]
        %v409 = vld [vmem:[#allocation6 + $0x10] sm:$0xff]
        %v410 = vld [vmem:[#allocation6 + $0x18] sm:$0xff]
        %v411 = vld [vmem:[%s4] sm:$0x1]
        %v413 = vperm.slane %v411, 0
        %vm415 = vcmask 261120
        %v417 = vsel %vm415, %v406, 0
        %419 = vmatpush.msra.mxu0 0.0
        %420 = vmatpush.msra.mxu0 0.0
        %421 = vmatpush.msra.mxu0 0.0
        %422 = vmatpush.msra.mxu0 0.0
        %423 = vmatpush.msra.mxu0 0.0
        %424 = vmatpush.msra.mxu0 0.0
        %425 = vmatpush.msra.mxu0 0.0
        %426 = vmatpush.msra.mxu0 0.0
        %427 = vmatpush.msra.mxu0 0.0
        %428 = vmatpush.msra.mxu0 0.0
        %429 = vmatpush.msra.mxu0 0.0
        %430 = vmatpush.msra.mxu0 0.0
        %431 = vmatpush.msra.mxu0 %v410
        %432 = vmatpush.msra.mxu0 %v409
        %433 = vmatpush.msra.mxu0 %v408
        %434 = vmatpush.msra.mxu0 %v407
        %435 = vmatmul.f32.gmra.mxu0 %v417
        %v436 = vpop.f32.mrf.mxu0
        %v437 = vadd.f32 %v413, %v436
        %438 = vdwg.mxu0
        %439 = vst [vmem:[#allocation2] sm:$0xff] %v437
        %440 = vst [vmem:[%s395] sm:$0xff] %v437
        %v441 = vld [vmem:[%s5] sm:$0x1]
        %v442 = vld [vmem:[%s6] sm:$0x1]
        %v443 = vld [vmem:[#allocation9] sm:$0xff]
        %v444 = vld [vmem:[#allocation9 + $0x8] sm:$0xff]
        %v445 = vld [vmem:[#allocation9 + $0x10] sm:$0xff]
        %v446 = vld [vmem:[#allocation9 + $0x18] sm:$0xff]
        %v447 = vld [vmem:[#allocation9 + $0x20] sm:$0xff]
        %v448 = vld [vmem:[#allocation9 + $0x28] sm:$0xff]
        %v449 = vld [vmem:[#allocation9 + $0x30] sm:$0xff]
        %v450 = vld [vmem:[#allocation9 + $0x38] sm:$0xff]
        %v451 = vld [vmem:[#allocation9 + $0x40] sm:$0xff]
        %v452 = vld [vmem:[#allocation9 + $0x48] sm:$0xff]
        %v453 = vld [vmem:[#allocation9 + $0x50] sm:$0xff]
        %v454 = vld [vmem:[#allocation9 + $0x58] sm:$0xff]
        %v455 = vld [vmem:[#allocation9 + $0x60] sm:$0xff]
        %v456 = vld [vmem:[#allocation9 + $0x68] sm:$0xff]
        %v457 = vld [vmem:[#allocation9 + $0x70] sm:$0xff]
        %v458 = vld [vmem:[#allocation9 + $0x78] sm:$0xff]
        %v459 = vlaneseq
        %v460 = vand.u32 %v459, 127
        %v461 = vlaneseq
        %v462 = vshrl.u32 %v461, 7
        %v463 = vadd.s32 %v462, 8
        %v464 = vadd.s32 %v462, 16
        %v465 = vadd.s32 %v462, 24
        %v466 = vadd.s32 %v462, 32
        %v467 = vadd.s32 %v462, 40
        %v468 = vadd.s32 %v462, 48
        %v469 = vadd.s32 %v462, 56
        %v470 = vadd.s32 %v462, 64
        %v471 = vadd.s32 %v462, 72
        %v472 = vadd.s32 %v462, 80
        %v473 = vadd.s32 %v462, 88
        %v474 = vadd.s32 %v462, 96
        %v475 = vadd.s32 %v462, 104
        %v476 = vadd.s32 %v462, 112
        %v477 = vadd.s32 %v462, 120
        %v478 = vld [vmem:[%s403] sm:$0xff]
        %479 = vset.pattern.permute.xlu0 0
        %480 = vperm.xlu0 %479, %v478
        %v481 = vpop.permute.xlu0 %480
        %vm482 = vcmp.eq.s32.totalorder %v460, %v481
        %v483 = vsel %vm482, 1, 0
        %v484 = vcvt.s32.f32 %v483
        %485 = vset.pattern.permute.xlu0 1
        %486 = vperm.xlu0 %485, %v478
        %v487 = vpop.permute.xlu0 %486
        %vm488 = vcmp.eq.s32.totalorder %v460, %v487
        %v489 = vsel %vm488, 1, 0
        %v490 = vcvt.s32.f32 %v489
        %v491 = vstv %s404
        %vm492 = vcmp.lt.s32.totalorder %v462, %v491
        %v493 = vsel %vm492, 1, 0
        %v494 = vcvt.s32.f32 %v493
        %vm495 = vcmp.ge.s32.totalorder %v462, 1
        %vm496 = vmand %vm495, %vm492
        %v497 = vsel %vm496, 1, 0
        %v498 = vcvt.s32.f32 %v497
        %v499 = vmul.f32 %v437, %v484
        %v500 = vmul.f32 %v499, %v494
        %501 = vadd.xlane.f32.xlu0 %v500
        %v502 = vpop.xlane.xlu0 %501
        %v503 = vrot.slane %v502, 4
        %v504 = vadd.f32 %v502, %v503
        %v505 = vrot.slane %v504, 2
        %v506 = vadd.f32 %v504, %v505
        %v507 = vrot.slane %v506, 1
        %v508 = vadd.f32 %v506, %v507
        %s509 = vtos %v508
        %510 = vmatpush.msra.mxu0 %v458
        %511 = vmatpush.msra.mxu0 %v457
        %512 = vmatpush.msra.mxu0 %v456
        %513 = vmatpush.msra.mxu0 %v455
        %514 = vmatpush.msra.mxu0 %v454
        %515 = vmatpush.msra.mxu0 %v453
        %516 = vmatpush.msra.mxu0 %v452
        %517 = vmatpush.msra.mxu0 %v451
        %518 = vmatpush.msra.mxu0 %v450
        %519 = vmatpush.msra.mxu0 %v449
        %520 = vmatpush.msra.mxu0 %v448
        %521 = vmatpush.msra.mxu0 %v447
        %522 = vmatpush.msra.mxu0 %v446
        %523 = vmatpush.msra.mxu0 %v445
        %524 = vmatpush.msra.mxu0 %v444
        %525 = vmatpush.msra.mxu0 %v443
        %526 = vmatmul.f32.gmra.mxu0 %v490
        %v527 = vpop.f32.mrf.mxu0
        %v528 = vadd.f32 0.0, %v527
        %529 = vdwg.mxu0
        %v530 = vmul.f32 %v528, %v484
        %v531 = vmul.f32 %v530, %v498
        %532 = vadd.xlane.f32.xlu0 %v531
        %v533 = vpop.xlane.xlu0 %532
        %v534 = vrot.slane %v533, 4
        %v535 = vadd.f32 %v533, %v534
        %v536 = vrot.slane %v535, 2
        %v537 = vadd.f32 %v535, %v536
        %v538 = vrot.slane %v537, 1
        %v539 = vadd.f32 %v537, %v538
        %s540 = vtos %v539
        %v541 = vmul.f32 %v441, %v484
        %vm542 = vcmask 1040384
        %v543 = vsel %vm542, %v541, 0.0
        %544 = vadd.xlane.f32.xlu0 %v543
        %v545 = vpop.xlane.xlu0 %544
        %v546 = vrot.slane %v545, 4
        %v547 = vadd.f32 %v545, %v546
        %v548 = vrot.slane %v547, 2
        %v549 = vadd.f32 %v547, %v548
        %v550 = vrot.slane %v549, 1
        %v551 = vadd.f32 %v549, %v550
        %s552 = vtos %v551
        %v553 = vstv %s405
        %vm554 = vcmp.eq.s32.totalorder %v462, %v553
        %v555 = vsel %vm554, 1, 0
        %v556 = vcvt.s32.f32 %v555
        %v557 = vmul.f32 %v484, %v556
        %v558 = vrot.slane %v557, 4
        %v559 = vadd.f32 %v557, %v558
        %v560 = vrot.slane %v559, 2
        %v561 = vadd.f32 %v559, %v560
        %v562 = vrot.slane %v561, 1
        %v563 = vadd.f32 %v561, %v562
        %v564 = vmul.f32 %v442, %v563
        %v565 = vsel %vm542, %v564, 0.0
        %566 = vadd.xlane.f32.xlu0 %v565
        %v567 = vpop.xlane.xlu0 %566
        %v568 = vrot.slane %v567, 4
        %v569 = vadd.f32 %v567, %v568
        %v570 = vrot.slane %v569, 2
        %v571 = vadd.f32 %v569, %v570
        %v572 = vrot.slane %v571, 1
        %v573 = vadd.f32 %v571, %v572
        %s574 = vtos %v573
        %s575 = sadd.f32 %s509, %s540
        %s576 = sadd.f32 %s575, %s552
        %s577 = sadd.f32 %s576, %s574
        %v578 = vadd.f32 %v441, %v437
        %579 = vxpose.xlu0.b32.start [1/16] %v578, 128
        %580 = vxpose.xlu0.b32.cont [2/16] 0.0, 128
        %581 = vxpose.xlu0.b32.cont [3/16] 0.0, 128
        %582 = vxpose.xlu0.b32.cont [4/16] 0.0, 128
        %583 = vxpose.xlu0.b32.cont [5/16] 0.0, 128
        %584 = vxpose.xlu0.b32.cont [6/16] 0.0, 128
        %585 = vxpose.xlu0.b32.cont [7/16] 0.0, 128
        %586 = vxpose.xlu0.b32.cont [8/16] 0.0, 128
        %587 = vxpose.xlu0.b32.cont [9/16] 0.0, 128
        %588 = vxpose.xlu0.b32.cont [10/16] 0.0, 128
        %589 = vxpose.xlu0.b32.cont [11/16] 0.0, 128
        %590 = vxpose.xlu0.b32.cont [12/16] 0.0, 128
        %591 = vxpose.xlu0.b32.cont [13/16] 0.0, 128
        %592 = vxpose.xlu0.b32.cont [14/16] 0.0, 128
        %593 = vxpose.xlu0.b32.cont [15/16] 0.0, 128
        %594 = vxpose.xlu0.b32.end [16/16] 0.0, 128
        %v595 = vpop.trf.xlu0
        %v596 = vpop.trf.xlu0
        %v597 = vpop.trf.xlu0
        %v598 = vpop.trf.xlu0
        %v599 = vpop.trf.xlu0
        %v600 = vpop.trf.xlu0
        %v601 = vpop.trf.xlu0
        %v602 = vpop.trf.xlu0
        %v603 = vpop.trf.xlu0
        %v604 = vpop.trf.xlu0
        %v605 = vpop.trf.xlu0
        %v606 = vpop.trf.xlu0
        %v607 = vpop.trf.xlu0
        %v608 = vpop.trf.xlu0
        %v609 = vpop.trf.xlu0
        %v610 = vpop.trf.xlu0
        loop: start=1, step=1, limit=8
        $region57: #{tpu_custom_call.1} parent=47 // loop_pre_header
          _
        $region58: #{tpu_custom_call.1} parent=47 // loop_header
          %s612 = sphi 1, %s616
          %p613 = scmp.ge.s32.totalorder %s612, 8
          %v617 = vphi %v595, %v893
          %v618 = vphi %v596, %v894
          %v619 = vphi %v597, %v895
          %v620 = vphi %v598, %v896
          %v621 = vphi %v599, %v897
          %v622 = vphi %v600, %v898
          %v623 = vphi %v601, %v899
          %v624 = vphi %v602, %v900
          %v625 = vphi %v603, %v901
          %v626 = vphi %v604, %v902
          %v627 = vphi %v605, %v903
          %v628 = vphi %v606, %v904
          %v629 = vphi %v607, %v905
          %v630 = vphi %v608, %v906
          %v631 = vphi %v609, %v907
          %v632 = vphi %v610, %v908
          %v633 = vphi %v595, %v1147
          %v634 = vphi %v596, %v1148
          %v635 = vphi %v597, %v1149
          %v636 = vphi %v598, %v1150
          %v637 = vphi %v599, %v1151
          %v638 = vphi %v600, %v1152
          %v639 = vphi %v601, %v1153
          %v640 = vphi %v602, %v1154
          %v641 = vphi %v603, %v1155
          %v642 = vphi %v604, %v1156
          %v643 = vphi %v605, %v1157
          %v644 = vphi %v606, %v1158
          %v645 = vphi %v607, %v1159
          %v646 = vphi %v608, %v1160
          %v647 = vphi %v609, %v1161
          %v648 = vphi %v610, %v1162
        $region59: #{tpu_custom_call.1} parent=47 // loop_header_branch
          %615 = sbr.rel (%p613) target = $region63
        $region60: #{tpu_custom_call.1} parent=47 // loop_body
          %s649 = scalar_lea.vmem [#allocation2], %s612
          %v650 = vld [vmem:[%s649] sm:$0x1]
          %p651 = scmp.lt.s32.totalorder %s612, %s404
          %653 = vset.pattern.permute.xlu0 0
          %654 = vperm.xlu0 %653, %v617
          %v655 = vpop.permute.xlu0 %654
          %658 = vset.pattern.permute.xlu0 0
          %659 = vperm.xlu0 %658, %v618
          %v660 = vpop.permute.xlu0 %659
          %663 = vset.pattern.permute.xlu0 0
          %664 = vperm.xlu0 %663, %v619
          %v665 = vpop.permute.xlu0 %664
          %668 = vset.pattern.permute.xlu0 0
          %669 = vperm.xlu0 %668, %v620
          %v670 = vpop.permute.xlu0 %669
          %673 = vset.pattern.permute.xlu0 0
          %674 = vperm.xlu0 %673, %v621
          %v675 = vpop.permute.xlu0 %674
          %678 = vset.pattern.permute.xlu0 0
          %679 = vperm.xlu0 %678, %v622
          %v680 = vpop.permute.xlu0 %679
          %683 = vset.pattern.permute.xlu0 0
          %684 = vperm.xlu0 %683, %v623
          %v685 = vpop.permute.xlu0 %684
          %688 = vset.pattern.permute.xlu0 0
          %689 = vperm.xlu0 %688, %v624
          %v690 = vpop.permute.xlu0 %689
          %693 = vset.pattern.permute.xlu0 0
          %694 = vperm.xlu0 %693, %v625
          %v695 = vpop.permute.xlu0 %694
          %698 = vset.pattern.permute.xlu0 0
          %699 = vperm.xlu0 %698, %v626
          %v700 = vpop.permute.xlu0 %699
          %703 = vset.pattern.permute.xlu0 0
          %704 = vperm.xlu0 %703, %v627
          %v705 = vpop.permute.xlu0 %704
          %708 = vset.pattern.permute.xlu0 0
          %709 = vperm.xlu0 %708, %v628
          %v710 = vpop.permute.xlu0 %709
          %713 = vset.pattern.permute.xlu0 0
          %714 = vperm.xlu0 %713, %v629
          %v715 = vpop.permute.xlu0 %714
          %718 = vset.pattern.permute.xlu0 0
          %719 = vperm.xlu0 %718, %v630
          %v720 = vpop.permute.xlu0 %719
          %723 = vset.pattern.permute.xlu0 0
          %724 = vperm.xlu0 %723, %v631
          %v725 = vpop.permute.xlu0 %724
          %728 = vset.pattern.permute.xlu0 0
          %729 = vperm.xlu0 %728, %v632
          %v730 = vpop.permute.xlu0 %729
          %v732 = vadd.f32 %v655, %v443
          %v733 = vadd.f32 %v660, %v444
          %v734 = vadd.f32 %v665, %v445
          %v735 = vadd.f32 %v670, %v446
          %v736 = vadd.f32 %v675, %v447
          %v737 = vadd.f32 %v680, %v448
          %v738 = vadd.f32 %v685, %v449
          %v739 = vadd.f32 %v690, %v450
          %v740 = vadd.f32 %v695, %v451
          %v741 = vadd.f32 %v700, %v452
          %v742 = vadd.f32 %v705, %v453
          %v743 = vadd.f32 %v710, %v454
          %v744 = vadd.f32 %v715, %v455
          %v745 = vadd.f32 %v720, %v456
          %v746 = vadd.f32 %v725, %v457
          %v747 = vadd.f32 %v730, %v458
          %v748 = vperm.slane %v650, 0
          %v749 = vadd.f32 %v732, %v748
          %v750 = vadd.f32 %v733, %v748
          %v751 = vadd.f32 %v734, %v748
          %v752 = vadd.f32 %v735, %v748
          %v753 = vadd.f32 %v736, %v748
          %v754 = vadd.f32 %v737, %v748
          %v755 = vadd.f32 %v738, %v748
          %v756 = vadd.f32 %v739, %v748
          %v757 = vadd.f32 %v740, %v748
          %v758 = vadd.f32 %v741, %v748
          %v759 = vadd.f32 %v742, %v748
          %v760 = vadd.f32 %v743, %v748
          %v761 = vadd.f32 %v744, %v748
          %v762 = vadd.f32 %v745, %v748
          %v763 = vadd.f32 %v746, %v748
          %v764 = vadd.f32 %v747, %v748
          %v765 = vmax.f32 %v749, %v753
          %v766 = vmax.f32 %v750, %v754
          %v767 = vmax.f32 %v751, %v755
          %v768 = vmax.f32 %v752, %v756
          %v769 = vmax.f32 %v765, %v757
          %v770 = vmax.f32 %v766, %v758
          %v771 = vmax.f32 %v767, %v759
          %v772 = vmax.f32 %v768, %v760
          %v773 = vmax.f32 %v769, %v761
          %v774 = vmax.f32 %v770, %v762
          %v775 = vmax.f32 %v771, %v763
          %v776 = vmax.f32 %v772, %v764
          %v777 = vmax.f32 %v773, %v774
          %v778 = vmax.f32 %v775, %v776
          %v779 = vmax.f32 %v777, %v778
          %v780 = vrot.slane %v779, 4
          %v781 = vmax.f32 %v779, %v780
          %v782 = vrot.slane %v781, 2
          %v783 = vmax.f32 %v781, %v782
          %v784 = vrot.slane %v783, 1
          %v785 = vmax.f32 %v783, %v784
          %v786 = vsub.f32 %v749, %v785
          %v787 = vsub.f32 %v750, %v785
          %v788 = vsub.f32 %v751, %v785
          %v789 = vsub.f32 %v752, %v785
          %v790 = vsub.f32 %v753, %v785
          %v791 = vsub.f32 %v754, %v785
          %v792 = vsub.f32 %v755, %v785
          %v793 = vsub.f32 %v756, %v785
          %v794 = vsub.f32 %v757, %v785
          %v795 = vsub.f32 %v758, %v785
          %v796 = vsub.f32 %v759, %v785
          %v797 = vsub.f32 %v760, %v785
          %v798 = vsub.f32 %v761, %v785
          %v799 = vsub.f32 %v762, %v785
          %v800 = vsub.f32 %v763, %v785
          %v801 = vsub.f32 %v764, %v785
          %v802 = vmul.f32 %v786, 1.442695
          %v803 = vpow.pop %v802
          %v804 = vmul.f32 %v787, 1.442695
          %v805 = vpow.pop %v804
          %v806 = vmul.f32 %v788, 1.442695
          %v807 = vpow.pop %v806
          %v808 = vmul.f32 %v789, 1.442695
          %v809 = vpow.pop %v808
          %v810 = vmul.f32 %v790, 1.442695
          %v811 = vpow.pop %v810
          %v812 = vmul.f32 %v791, 1.442695
          %v813 = vpow.pop %v812
          %v814 = vmul.f32 %v792, 1.442695
          %v815 = vpow.pop %v814
          %v816 = vmul.f32 %v793, 1.442695
          %v817 = vpow.pop %v816
          %v818 = vmul.f32 %v794, 1.442695
          %v819 = vpow.pop %v818
          %v820 = vmul.f32 %v795, 1.442695
          %v821 = vpow.pop %v820
          %v822 = vmul.f32 %v796, 1.442695
          %v823 = vpow.pop %v822
          %v824 = vmul.f32 %v797, 1.442695
          %v825 = vpow.pop %v824
          %v826 = vmul.f32 %v798, 1.442695
          %v827 = vpow.pop %v826
          %v828 = vmul.f32 %v799, 1.442695
          %v829 = vpow.pop %v828
          %v830 = vmul.f32 %v800, 1.442695
          %v831 = vpow.pop %v830
          %v832 = vmul.f32 %v801, 1.442695
          %v833 = vpow.pop %v832
          %v834 = vadd.f32 %v803, %v805
          %v835 = vadd.f32 %v834, %v807
          %v836 = vadd.f32 %v835, %v809
          %v837 = vadd.f32 %v836, %v811
          %v838 = vadd.f32 %v837, %v813
          %v839 = vadd.f32 %v838, %v815
          %v840 = vadd.f32 %v839, %v817
          %v841 = vadd.f32 %v840, %v819
          %v842 = vadd.f32 %v841, %v821
          %v843 = vadd.f32 %v842, %v823
          %v844 = vadd.f32 %v843, %v825
          %v845 = vadd.f32 %v844, %v827
          %v846 = vadd.f32 %v845, %v829
          %v847 = vadd.f32 %v846, %v831
          %v848 = vadd.f32 %v847, %v833
          %v849 = vrot.slane %v848, 4
          %v850 = vadd.f32 %v848, %v849
          %v851 = vrot.slane %v850, 2
          %v852 = vadd.f32 %v850, %v851
          %v853 = vrot.slane %v852, 1
          %v854 = vadd.f32 %v852, %v853
          %v855 = vlog2.pop %v854
          %v856 = vmul.f32 %v855, 0.6931472
          %v857 = vadd.f32 %v785, %v856
          %858 = vxpose.xlu0.b32.start [1/16] %v857, 128
          %859 = vxpose.xlu0.b32.cont [2/16] 0.0, 128
          %860 = vxpose.xlu0.b32.cont [3/16] 0.0, 128
          %861 = vxpose.xlu0.b32.cont [4/16] 0.0, 128
          %862 = vxpose.xlu0.b32.cont [5/16] 0.0, 128
          %863 = vxpose.xlu0.b32.cont [6/16] 0.0, 128
          %864 = vxpose.xlu0.b32.cont [7/16] 0.0, 128
          %865 = vxpose.xlu0.b32.cont [8/16] 0.0, 128
          %866 = vxpose.xlu0.b32.cont [9/16] 0.0, 128
          %867 = vxpose.xlu0.b32.cont [10/16] 0.0, 128
          %868 = vxpose.xlu0.b32.cont [11/16] 0.0, 128
          %869 = vxpose.xlu0.b32.cont [12/16] 0.0, 128
          %870 = vxpose.xlu0.b32.cont [13/16] 0.0, 128
          %871 = vxpose.xlu0.b32.cont [14/16] 0.0, 128
          %872 = vxpose.xlu0.b32.cont [15/16] 0.0, 128
          %873 = vxpose.xlu0.b32.end [16/16] 0.0, 128
          %v874 = vpop.trf.xlu0
          %v875 = vpop.trf.xlu0
          %v876 = vpop.trf.xlu0
          %v877 = vpop.trf.xlu0
          %v878 = vpop.trf.xlu0
          %v879 = vpop.trf.xlu0
          %v880 = vpop.trf.xlu0
          %v881 = vpop.trf.xlu0
          %v882 = vpop.trf.xlu0
          %v883 = vpop.trf.xlu0
          %v884 = vpop.trf.xlu0
          %v885 = vpop.trf.xlu0
          %v886 = vpop.trf.xlu0
          %v887 = vpop.trf.xlu0
          %v888 = vpop.trf.xlu0
          %v889 = vpop.trf.xlu0
          %s890 = scalar_select %p651, 1, 0
          %v891 = vstv %s890
          %vm892 = vcmp.eq.s32.totalorder %v891, 1
          %v893 = vsel %vm892, %v874, %v617
          %v894 = vsel %vm892, %v875, %v618
          %v895 = vsel %vm892, %v876, %v619
          %v896 = vsel %vm892, %v877, %v620
          %v897 = vsel %vm892, %v878, %v621
          %v898 = vsel %vm892, %v879, %v622
          %v899 = vsel %vm892, %v880, %v623
          %v900 = vsel %vm892, %v881, %v624
          %v901 = vsel %vm892, %v882, %v625
          %v902 = vsel %vm892, %v883, %v626
          %v903 = vsel %vm892, %v884, %v627
          %v904 = vsel %vm892, %v885, %v628
          %v905 = vsel %vm892, %v886, %v629
          %v906 = vsel %vm892, %v887, %v630
          %v907 = vsel %vm892, %v888, %v631
          %v908 = vsel %vm892, %v889, %v632
          %910 = vset.pattern.permute.xlu0 0
          %911 = vperm.xlu0 %910, %v633
          %v912 = vpop.permute.xlu0 %911
          %915 = vset.pattern.permute.xlu0 0
          %916 = vperm.xlu0 %915, %v634
          %v917 = vpop.permute.xlu0 %916
          %920 = vset.pattern.permute.xlu0 0
          %921 = vperm.xlu0 %920, %v635
          %v922 = vpop.permute.xlu0 %921
          %925 = vset.pattern.permute.xlu0 0
          %926 = vperm.xlu0 %925, %v636
          %v927 = vpop.permute.xlu0 %926
          %930 = vset.pattern.permute.xlu0 0
          %931 = vperm.xlu0 %930, %v637
          %v932 = vpop.permute.xlu0 %931
          %935 = vset.pattern.permute.xlu0 0
          %936 = vperm.xlu0 %935, %v638
          %v937 = vpop.permute.xlu0 %936
          %940 = vset.pattern.permute.xlu0 0
          %941 = vperm.xlu0 %940, %v639
          %v942 = vpop.permute.xlu0 %941
          %945 = vset.pattern.permute.xlu0 0
          %946 = vperm.xlu0 %945, %v640
          %v947 = vpop.permute.xlu0 %946
          %950 = vset.pattern.permute.xlu0 0
          %951 = vperm.xlu0 %950, %v641
          %v952 = vpop.permute.xlu0 %951
          %955 = vset.pattern.permute.xlu0 0
          %956 = vperm.xlu0 %955, %v642
          %v957 = vpop.permute.xlu0 %956
          %960 = vset.pattern.permute.xlu0 0
          %961 = vperm.xlu0 %960, %v643
          %v962 = vpop.permute.xlu0 %961
          %965 = vset.pattern.permute.xlu0 0
          %966 = vperm.xlu0 %965, %v644
          %v967 = vpop.permute.xlu0 %966
          %970 = vset.pattern.permute.xlu0 0
          %971 = vperm.xlu0 %970, %v645
          %v972 = vpop.permute.xlu0 %971
          %975 = vset.pattern.permute.xlu0 0
          %976 = vperm.xlu0 %975, %v646
          %v977 = vpop.permute.xlu0 %976
          %980 = vset.pattern.permute.xlu0 0
          %981 = vperm.xlu0 %980, %v647
          %v982 = vpop.permute.xlu0 %981
          %985 = vset.pattern.permute.xlu0 0
          %986 = vperm.xlu0 %985, %v648
          %v987 = vpop.permute.xlu0 %986
          %v989 = vadd.f32 %v912, %v443
          %v990 = vadd.f32 %v917, %v444
          %v991 = vadd.f32 %v922, %v445
          %v992 = vadd.f32 %v927, %v446
          %v993 = vadd.f32 %v932, %v447
          %v994 = vadd.f32 %v937, %v448
          %v995 = vadd.f32 %v942, %v449
          %v996 = vadd.f32 %v947, %v450
          %v997 = vadd.f32 %v952, %v451
          %v998 = vadd.f32 %v957, %v452
          %v999 = vadd.f32 %v962, %v453
          %v1000 = vadd.f32 %v967, %v454
          %v1001 = vadd.f32 %v972, %v455
          %v1002 = vadd.f32 %v977, %v456
          %v1003 = vadd.f32 %v982, %v457
          %v1004 = vadd.f32 %v987, %v458
          %v1005 = vadd.f32 %v989, %v748
          %v1006 = vadd.f32 %v990, %v748
          %v1007 = vadd.f32 %v991, %v748
          %v1008 = vadd.f32 %v992, %v748
          %v1009 = vadd.f32 %v993, %v748
          %v1010 = vadd.f32 %v994, %v748
          %v1011 = vadd.f32 %v995, %v748
          %v1012 = vadd.f32 %v996, %v748
          %v1013 = vadd.f32 %v997, %v748
          %v1014 = vadd.f32 %v998, %v748
          %v1015 = vadd.f32 %v999, %v748
          %v1016 = vadd.f32 %v1000, %v748
          %v1017 = vadd.f32 %v1001, %v748
          %v1018 = vadd.f32 %v1002, %v748
          %v1019 = vadd.f32 %v1003, %v748
          %v1020 = vadd.f32 %v1004, %v748
          %v1021 = vmax.f32 %v1005, %v1009
          %v1022 = vmax.f32 %v1006, %v1010
          %v1023 = vmax.f32 %v1007, %v1011
          %v1024 = vmax.f32 %v1008, %v1012
          %v1025 = vmax.f32 %v1021, %v1013
          %v1026 = vmax.f32 %v1022, %v1014
          %v1027 = vmax.f32 %v1023, %v1015
          %v1028 = vmax.f32 %v1024, %v1016
          %v1029 = vmax.f32 %v1025, %v1017
          %v1030 = vmax.f32 %v1026, %v1018
          %v1031 = vmax.f32 %v1027, %v1019
          %v1032 = vmax.f32 %v1028, %v1020
          %v1033 = vmax.f32 %v1029, %v1030
          %v1034 = vmax.f32 %v1031, %v1032
          %v1035 = vmax.f32 %v1033, %v1034
          %v1036 = vrot.slane %v1035, 4
          %v1037 = vmax.f32 %v1035, %v1036
          %v1038 = vrot.slane %v1037, 2
          %v1039 = vmax.f32 %v1037, %v1038
          %v1040 = vrot.slane %v1039, 1
          %v1041 = vmax.f32 %v1039, %v1040
          %vm1042 = vcmp.eq.f32.partialorder %v1005, %v1041
          %vm1043 = vcmp.eq.f32.partialorder %v1006, %v1041
          %vm1044 = vcmp.eq.f32.partialorder %v1007, %v1041
          %vm1045 = vcmp.eq.f32.partialorder %v1008, %v1041
          %vm1046 = vcmp.eq.f32.partialorder %v1009, %v1041
          %vm1047 = vcmp.eq.f32.partialorder %v1010, %v1041
          %vm1048 = vcmp.eq.f32.partialorder %v1011, %v1041
          %vm1049 = vcmp.eq.f32.partialorder %v1012, %v1041
          %vm1050 = vcmp.eq.f32.partialorder %v1013, %v1041
          %vm1051 = vcmp.eq.f32.partialorder %v1014, %v1041
          %vm1052 = vcmp.eq.f32.partialorder %v1015, %v1041
          %vm1053 = vcmp.eq.f32.partialorder %v1016, %v1041
          %vm1054 = vcmp.eq.f32.partialorder %v1017, %v1041
          %vm1055 = vcmp.eq.f32.partialorder %v1018, %v1041
          %vm1056 = vcmp.eq.f32.partialorder %v1019, %v1041
          %vm1057 = vcmp.eq.f32.partialorder %v1020, %v1041
          %v1058 = vsel %vm1042, %v462, 128
          %v1059 = vsel %vm1043, %v463, 128
          %v1060 = vsel %vm1044, %v464, 128
          %v1061 = vsel %vm1045, %v465, 128
          %v1062 = vsel %vm1046, %v466, 128
          %v1063 = vsel %vm1047, %v467, 128
          %v1064 = vsel %vm1048, %v468, 128
          %v1065 = vsel %vm1049, %v469, 128
          %v1066 = vsel %vm1050, %v470, 128
          %v1067 = vsel %vm1051, %v471, 128
          %v1068 = vsel %vm1052, %v472, 128
          %v1069 = vsel %vm1053, %v473, 128
          %v1070 = vsel %vm1054, %v474, 128
          %v1071 = vsel %vm1055, %v475, 128
          %v1072 = vsel %vm1056, %v476, 128
          %v1073 = vsel %vm1057, %v477, 128
          %vm1074 = vcmp.lt.s32.totalorder %v1058, %v1062
          %v1075 = vsel %vm1074, %v1058, %v1062
          %vm1076 = vcmp.lt.s32.totalorder %v1059, %v1063
          %v1077 = vsel %vm1076, %v1059, %v1063
          %vm1078 = vcmp.lt.s32.totalorder %v1060, %v1064
          %v1079 = vsel %vm1078, %v1060, %v1064
          %vm1080 = vcmp.lt.s32.totalorder %v1061, %v1065
          %v1081 = vsel %vm1080, %v1061, %v1065
          %vm1082 = vcmp.lt.s32.totalorder %v1075, %v1066
          %v1083 = vsel %vm1082, %v1075, %v1066
          %vm1084 = vcmp.lt.s32.totalorder %v1077, %v1067
          %v1085 = vsel %vm1084, %v1077, %v1067
          %vm1086 = vcmp.lt.s32.totalorder %v1079, %v1068
          %v1087 = vsel %vm1086, %v1079, %v1068
          %vm1088 = vcmp.lt.s32.totalorder %v1081, %v1069
          %v1089 = vsel %vm1088, %v1081, %v1069
          %vm1090 = vcmp.lt.s32.totalorder %v1083, %v1070
          %v1091 = vsel %vm1090, %v1083, %v1070
          %vm1092 = vcmp.lt.s32.totalorder %v1085, %v1071
          %v1093 = vsel %vm1092, %v1085, %v1071
          %vm1094 = vcmp.lt.s32.totalorder %v1087, %v1072
          %v1095 = vsel %vm1094, %v1087, %v1072
          %vm1096 = vcmp.lt.s32.totalorder %v1089, %v1073
          %v1097 = vsel %vm1096, %v1089, %v1073
          %vm1098 = vcmp.lt.s32.totalorder %v1091, %v1093
          %v1099 = vsel %vm1098, %v1091, %v1093
          %vm1100 = vcmp.lt.s32.totalorder %v1095, %v1097
          %v1101 = vsel %vm1100, %v1095, %v1097
          %vm1102 = vcmp.lt.s32.totalorder %v1099, %v1101
          %v1103 = vsel %vm1102, %v1099, %v1101
          %v1104 = vrot.slane %v1103, 4
          %vm1105 = vcmp.lt.s32.totalorder %v1103, %v1104
          %v1106 = vsel %vm1105, %v1103, %v1104
          %v1107 = vrot.slane %v1106, 2
          %vm1108 = vcmp.lt.s32.totalorder %v1106, %v1107
          %v1109 = vsel %vm1108, %v1106, %v1107
          %v1110 = vrot.slane %v1109, 1
          %vm1111 = vcmp.lt.s32.totalorder %v1109, %v1110
          %v1112 = vsel %vm1111, %v1109, %v1110
          %s1113 = scalar_lea.vmem [#allocation3], %s612
          %1114 = vst [vmem:[%s1113] sm:$0x1] %v1112
          %1115 = vxpose.xlu0.b32.start [1/16] %v1041, 128
          %1116 = vxpose.xlu0.b32.cont [2/16] 0.0, 128
          %1117 = vxpose.xlu0.b32.cont [3/16] 0.0, 128
          %1118 = vxpose.xlu0.b32.cont [4/16] 0.0, 128
          %1119 = vxpose.xlu0.b32.cont [5/16] 0.0, 128
          %1120 = vxpose.xlu0.b32.cont [6/16] 0.0, 128
          %1121 = vxpose.xlu0.b32.cont [7/16] 0.0, 128
          %1122 = vxpose.xlu0.b32.cont [8/16] 0.0, 128
          %1123 = vxpose.xlu0.b32.cont [9/16] 0.0, 128
          %1124 = vxpose.xlu0.b32.cont [10/16] 0.0, 128
          %1125 = vxpose.xlu0.b32.cont [11/16] 0.0, 128
          %1126 = vxpose.xlu0.b32.cont [12/16] 0.0, 128
          %1127 = vxpose.xlu0.b32.cont [13/16] 0.0, 128
          %1128 = vxpose.xlu0.b32.cont [14/16] 0.0, 128
          %1129 = vxpose.xlu0.b32.cont [15/16] 0.0, 128
          %1130 = vxpose.xlu0.b32.end [16/16] 0.0, 128
          %v1131 = vpop.trf.xlu0
          %v1132 = vpop.trf.xlu0
          %v1133 = vpop.trf.xlu0
          %v1134 = vpop.trf.xlu0
          %v1135 = vpop.trf.xlu0
          %v1136 = vpop.trf.xlu0
          %v1137 = vpop.trf.xlu0
          %v1138 = vpop.trf.xlu0
          %v1139 = vpop.trf.xlu0
          %v1140 = vpop.trf.xlu0
          %v1141 = vpop.trf.xlu0
          %v1142 = vpop.trf.xlu0
          %v1143 = vpop.trf.xlu0
          %v1144 = vpop.trf.xlu0
          %v1145 = vpop.trf.xlu0
          %v1146 = vpop.trf.xlu0
          %v1147 = vsel %vm892, %v1131, %v633
          %v1148 = vsel %vm892, %v1132, %v634
          %v1149 = vsel %vm892, %v1133, %v635
          %v1150 = vsel %vm892, %v1134, %v636
          %v1151 = vsel %vm892, %v1135, %v637
          %v1152 = vsel %vm892, %v1136, %v638
          %v1153 = vsel %vm892, %v1137, %v639
          %v1154 = vsel %vm892, %v1138, %v640
          %v1155 = vsel %vm892, %v1139, %v641
          %v1156 = vsel %vm892, %v1140, %v642
          %v1157 = vsel %vm892, %v1141, %v643
          %v1158 = vsel %vm892, %v1142, %v644
          %v1159 = vsel %vm892, %v1143, %v645
          %v1160 = vsel %vm892, %v1144, %v646
          %v1161 = vsel %vm892, %v1145, %v647
          %v1162 = vsel %vm892, %v1146, %v648
        $region61: #{tpu_custom_call.1} parent=47 // loop_footer
          %s616 = sadd.s32 1, %s612
        $region62: #{tpu_custom_call.1} parent=47 // loop_footer_branch
          %611 = sbr.rel target = $region58
        $region63: #{tpu_custom_call.1} parent=47 // loop_exit
          _
        %1163 = vxpose.xlu0.b32.start [1/16] %v617, 128
        %1164 = vxpose.xlu0.b32.cont [2/16] %v618, 128
        %1165 = vxpose.xlu0.b32.cont [3/16] %v619, 128
        %1166 = vxpose.xlu0.b32.cont [4/16] %v620, 128
        %1167 = vxpose.xlu0.b32.cont [5/16] %v621, 128
        %1168 = vxpose.xlu0.b32.cont [6/16] %v622, 128
        %1169 = vxpose.xlu0.b32.cont [7/16] %v623, 128
        %1170 = vxpose.xlu0.b32.cont [8/16] %v624, 128
        %1171 = vxpose.xlu0.b32.cont [9/16] %v625, 128
        %1172 = vxpose.xlu0.b32.cont [10/16] %v626, 128
        %1173 = vxpose.xlu0.b32.cont [11/16] %v627, 128
        %1174 = vxpose.xlu0.b32.cont [12/16] %v628, 128
        %1175 = vxpose.xlu0.b32.cont [13/16] %v629, 128
        %1176 = vxpose.xlu0.b32.cont [14/16] %v630, 128
        %1177 = vxpose.xlu0.b32.cont [15/16] %v631, 128
        %1178 = vxpose.xlu0.b32.end [16/16] %v632, 128
        %v1179 = vpop.trf.xlu0
        %v1180 = vpop.trf.xlu0
        %v1181 = vpop.trf.xlu0
        %v1182 = vpop.trf.xlu0
        %v1183 = vpop.trf.xlu0
        %v1184 = vpop.trf.xlu0
        %v1185 = vpop.trf.xlu0
        %v1186 = vpop.trf.xlu0
        %v1187 = vpop.trf.xlu0
        %v1188 = vpop.trf.xlu0
        %v1189 = vpop.trf.xlu0
        %v1190 = vpop.trf.xlu0
        %v1191 = vpop.trf.xlu0
        %v1192 = vpop.trf.xlu0
        %v1193 = vpop.trf.xlu0
        %v1194 = vpop.trf.xlu0
        %v1195 = vadd.f32 %v1179, %v442
        %v1196 = vsel %vm542, %v1195, -inf
        %1197 = vmax.xlane.f32.xlu0 %v1196
        %v1198 = vpop.xlane.xlu0 %1197
        %v1199 = vrot.slane %v1198, 4
        %v1200 = vmax.f32 %v1198, %v1199
        %v1201 = vrot.slane %v1200, 2
        %v1202 = vmax.f32 %v1200, %v1201
        %v1203 = vrot.slane %v1202, 1
        %v1204 = vmax.f32 %v1202, %v1203
        %s1205 = vtos %v1204
        %v1206 = vstv %s1205
        %v1207 = vsub.f32 %v1195, %v1206
        %v1208 = vmul.f32 %v1207, 1.442695
        %v1209 = vpow.pop %v1208
        %v1210 = vsel %vm542, %v1209, 0.0
        %1211 = vadd.xlane.f32.xlu0 %v1210
        %v1212 = vpop.xlane.xlu0 %1211
        %v1213 = vrot.slane %v1212, 4
        %v1214 = vadd.f32 %v1212, %v1213
        %v1215 = vrot.slane %v1214, 2
        %v1216 = vadd.f32 %v1214, %v1215
        %v1217 = vrot.slane %v1216, 1
        %v1218 = vadd.f32 %v1216, %v1217
        %s1219 = vtos %v1218
        %v1220 = vstv %s1219
        %v1221 = vlog2.pop %v1220
        %v1222 = vmul.f32 %v1221, 0.6931472
        %s1223 = vtos %v1222
        %s1224 = sadd.f32 %s1205, %s1223
        %1225 = vxpose.xlu0.b32.start [1/16] %v633, 128
        %1226 = vxpose.xlu0.b32.cont [2/16] %v634, 128
        %1227 = vxpose.xlu0.b32.cont [3/16] %v635, 128
        %1228 = vxpose.xlu0.b32.cont [4/16] %v636, 128
        %1229 = vxpose.xlu0.b32.cont [5/16] %v637, 128
        %1230 = vxpose.xlu0.b32.cont [6/16] %v638, 128
        %1231 = vxpose.xlu0.b32.cont [7/16] %v639, 128
        %1232 = vxpose.xlu0.b32.cont [8/16] %v640, 128
        %1233 = vxpose.xlu0.b32.cont [9/16] %v641, 128
        %1234 = vxpose.xlu0.b32.cont [10/16] %v642, 128
        %1235 = vxpose.xlu0.b32.cont [11/16] %v643, 128
        %1236 = vxpose.xlu0.b32.cont [12/16] %v644, 128
        %1237 = vxpose.xlu0.b32.cont [13/16] %v645, 128
        %1238 = vxpose.xlu0.b32.cont [14/16] %v646, 128
        %1239 = vxpose.xlu0.b32.cont [15/16] %v647, 128
        %1240 = vxpose.xlu0.b32.end [16/16] %v648, 128
        %v1241 = vpop.trf.xlu0
        %v1242 = vpop.trf.xlu0
        %v1243 = vpop.trf.xlu0
        %v1244 = vpop.trf.xlu0
        %v1245 = vpop.trf.xlu0
        %v1246 = vpop.trf.xlu0
        %v1247 = vpop.trf.xlu0
        %v1248 = vpop.trf.xlu0
        %v1249 = vpop.trf.xlu0
        %v1250 = vpop.trf.xlu0
        %v1251 = vpop.trf.xlu0
        %v1252 = vpop.trf.xlu0
        %v1253 = vpop.trf.xlu0
        %v1254 = vpop.trf.xlu0
        %v1255 = vpop.trf.xlu0
        %v1256 = vpop.trf.xlu0
        %v1257 = vadd.f32 %v1241, %v442
        %v1258 = vsel %vm542, %v1257, -inf
        %1259 = vmax.xlane.f32.xlu0 %v1258
        %v1260 = vpop.xlane.xlu0 %1259
        %v1261 = vrot.slane %v1260, 4
        %v1262 = vmax.f32 %v1260, %v1261
        %v1263 = vrot.slane %v1262, 2
        %v1264 = vmax.f32 %v1262, %v1263
        %v1265 = vrot.slane %v1264, 1
        %v1266 = vmax.f32 %v1264, %v1265
        %s1267 = vtos %v1266
        %v1268 = vstv %s1267
        %vm1269 = vcmp.eq.f32.partialorder %v1257, %v1268
        %v1270 = vsel %vm1269, %v460, 128
        %v1271 = vsel %vm542, %v1270, 2147483647
        %v1272 = vand.u32 %v1271, 65535
        %v1273 = vshra.s32 %v1271, 16
        %v1274 = vcvt.s32.f32 %v1272
        %v1275 = vcvt.s32.f32 %v1273
        %1276 = vmin.xlane.f32.xlu0 %v1275
        %v1277 = vpop.xlane.xlu0 %1276
        %vm1278 = vcmp.eq.f32.partialorder %v1275, %v1277
        %v1279 = vsel %vm1278, %v1274, inf
        %1280 = vmin.xlane.f32.xlu0 %v1279
        %v1281 = vpop.xlane.xlu0 %1280
        %v1282 = vcvt.f32.s32 %v1281
        %v1283 = vcvt.f32.s32 %v1277
        %v1284 = vshll.u32 %v1283, 16
        %v1285 = vadd.s32 %v1284, %v1282
        %v1286 = vrot.slane %v1285, 4
        %vm1287 = vcmp.lt.s32.totalorder %v1285, %v1286
        %v1288 = vsel %vm1287, %v1285, %v1286
        %v1289 = vrot.slane %v1288, 2
        %vm1290 = vcmp.lt.s32.totalorder %v1288, %v1289
        %v1291 = vsel %vm1290, %v1288, %v1289
        %v1292 = vrot.slane %v1291, 1
        %vm1293 = vcmp.lt.s32.totalorder %v1291, %v1292
        %v1294 = vsel %vm1293, %v1291, %v1292
        %s1295 = vtos %v1294
        %vm1296 = vcmp.eq.s32.totalorder %v460, 0
        %v1297 = vstv %s577
        %v1298 = vsel %vm1296, %v1297, 0.0
        %vm1299 = vcmp.eq.s32.totalorder %v460, 1
        %v1300 = vstv %s1224
        %v1301 = vsel %vm1299, %v1300, 0.0
        %v1302 = vadd.f32 %v1298, %v1301
        %1303 = vst [vmem:[%s388] sm:$0x1] %v1302
        %vm1304 = vcmp.eq.s32.totalorder %v460, %v553
        %v1305 = vstv %s1295
        %v1306 = vsel %vm1304, %v1305, 0
        loop: start=0, step=1, limit=7
        $region64: #{tpu_custom_call.1} parent=47 // loop_pre_header
          _
        $region65: #{tpu_custom_call.1} parent=47 // loop_header
          %s1308 = sphi 0, %s1312
          %p1309 = scmp.ge.s32.totalorder %s1308, 7
          %s1313 = sphi %s1295, %s1343
          %v1314 = vphi %v1306, %v1351
        $region66: #{tpu_custom_call.1} parent=47 // loop_header_branch
          %1311 = sbr.rel (%p1309) target = $region70
        $region67: #{tpu_custom_call.1} parent=47 // loop_body
          %s1315 = ssub.s32 6, %s1308
          %s1316 = ssub.s32 7, %s1308
          %s1317 = scalar_lea.vmem [#allocation3], %s1316
          %v1318 = vld [vmem:[%s1317] sm:$0x1]
          %v1319 = vstv %s1313
          %vm1320 = vcmp.eq.s32.totalorder %v460, %v1319
          %v1321 = vsel %vm1320, %v1318, 0
          %v1322 = vsel %vm542, %v1321, 0
          %v1323 = vand.u32 %v1322, 65535
          %v1324 = vshrl.u32 %v1322, 16
          %v1325 = vcvt.s32.f32 %v1323
          %v1326 = vcvt.s32.f32 %v1324
          %1327 = vadd.xlane.f32.xlu0 %v1325
          %v1328 = vpop.xlane.xlu0 %1327
          %1329 = vadd.xlane.f32.xlu0 %v1326
          %v1330 = vpop.xlane.xlu0 %1329
          %v1331 = vcvt.f32.s32 %v1328
          %v1332 = vcvt.f32.s32 %v1330
          %v1333 = vshll.u32 %v1332, 16
          %v1334 = vadd.s32 %v1333, %v1331
          %v1335 = vrot.slane %v1334, 4
          %v1336 = vadd.s32 %v1334, %v1335
          %v1337 = vrot.slane %v1336, 2
          %v1338 = vadd.s32 %v1336, %v1337
          %v1339 = vrot.slane %v1338, 1
          %v1340 = vadd.s32 %v1338, %v1339
          %s1341 = vtos %v1340
          %p1342 = scmp.lt.s32.totalorder %s1315, %s405
          %s1343 = scalar_select %p1342, %s1341, %s1313
          %v1344 = vstv %s1315
          %vm1345 = vcmp.eq.s32.totalorder %v460, %v1344
          %s1346 = scalar_select %p1342, 1, 0
          %v1347 = vstv %s1346
          %vm1348 = vcmp.eq.s32.totalorder %v1347, 1
          %vm1349 = vmand %vm1348, %vm1345
          %v1350 = vstv %s1343
          %v1351 = vsel %vm1349, %v1350, %v1314
        $region68: #{tpu_custom_call.1} parent=47 // loop_footer
          %s1312 = sadd.s32 1, %s1308
        $region69: #{tpu_custom_call.1} parent=47 // loop_footer_branch
          %1307 = sbr.rel target = $region65
        $region70: #{tpu_custom_call.1} parent=47 // loop_exit
          _
        %vm1352 = vcmask 57344
        %1353 = vst.msk [vmem:[%s382] sm:$0x1] %vm1352, %v1314
        %s1354 = sand.u32 %s203, 1
        %s1355 = scalar_lea.sflag [#allocation8], %s1354
        %s1356 = sand.u32 %s203, 1
        %s1357 = scalar_lea.vmem [#allocation11], %s1356
        %s1358 = sand.u32 %s38, 1
        %s1359 = scalar_lea.sflag [#allocation13], %s1358
        %s1360 = sand.u32 %s229, 1
        %s1361 = scalar_lea.vmem [#allocation12], %s1360
        %s1362 = sand.u32 %s38, 1
        %s1363 = scalar_lea.sflag [#allocation13], %s1362
        %s1364 = sand.u32 %s255, 1
        %s1365 = smul.addr %s1364, 8
        %s1366 = scalar_lea.vmem [#allocation14], %s1365
        // Predicated region
        $region71: #{tpu_custom_call.1} parent=47 // pred_check
          %p1367 = pneg %p213
        $region72: #{tpu_custom_call.1} parent=47 // pred_check_branch
          %1369 = sbr.rel (%p1367) target = $region74
        $region73: #{tpu_custom_call.1} parent=47 // pred_region
          %1371 = vsyncadd %s1355, 0
          %s1372 = scalar_lea.hbm %s8, %s38
          %s1374 = sshll.u32 %s1357, 4
          %s1375 = int_to_ptr.vmem [resolvable:$true] %s1374
          %s1376 = sshll.u32 %s1372, 4
          %s1377 = int_to_ptr.hbm [resolvable:$true] %s1376
          %1379 = dma.vmem_to_hbm [thread:$0]  %s1375, 16, %s1377, %s1355
        $region74: #{tpu_custom_call.1} parent=47 // pred_fallthru
          _
        // Predicated region
        $region75: #{tpu_custom_call.1} parent=47 // pred_check
          %p1380 = pneg %p239
        $region76: #{tpu_custom_call.1} parent=47 // pred_check_branch
          %1382 = sbr.rel (%p1380) target = $region78
        $region77: #{tpu_custom_call.1} parent=47 // pred_region
          %1384 = vsyncadd %s1359, 0
          %s1385 = scalar_lea.hbm %s9, %s38
          %s1387 = sshll.u32 %s1361, 4
          %s1388 = int_to_ptr.vmem [resolvable:$true] %s1387
          %s1389 = sshll.u32 %s1385, 4
          %s1390 = int_to_ptr.hbm [resolvable:$true] %s1389
          %1392 = dma.vmem_to_hbm [thread:$0]  %s1388, 16, %s1390, %s1359
        $region78: #{tpu_custom_call.1} parent=47 // pred_fallthru
          _
        // Predicated region
        $region79: #{tpu_custom_call.1} parent=47 // pred_check
          %p1393 = pneg %p265
        $region80: #{tpu_custom_call.1} parent=47 // pred_check_branch
          %1395 = sbr.rel (%p1393) target = $region82
        $region81: #{tpu_custom_call.1} parent=47 // pred_region
          %1397 = vsyncadd %s1363, 0
          %s1398 = smul.addr %s38, 8
          %s1399 = scalar_lea.hbm %s10, %s1398
          %s1401 = sshll.u32 %s1366, 4
          %s1402 = int_to_ptr.vmem [resolvable:$true] %s1401
          %s1403 = sshll.u32 %s1399, 4
          %s1404 = int_to_ptr.hbm [resolvable:$true] %s1403
          %1406 = dma.vmem_to_hbm [thread:$0]  %s1402, 128, %s1404, %s1363
        $region82: #{tpu_custom_call.1} parent=47 // pred_fallthru
          _
      $region48: #{tpu_custom_call.1} parent=5 // pred_fallthru
        _
      %p1407 = scmp.le.s32.totalorder 2, %s33
      // Predicated region
      $region83: #{tpu_custom_call.1} parent=5 // pred_check
        %p1408 = pneg %p1407
      $region84: #{tpu_custom_call.1} parent=5 // pred_check_branch
        %1410 = sbr.rel (%p1408) target = $region86
      $region85: #{tpu_custom_call.1} parent=5 // pred_region
        %s1411 = ssub.s32 %s33, 2
        // Predicated region
        $region87: #{tpu_custom_call.1} parent=85 // pred_check
          %p1412 = pneg %p219
        $region88: #{tpu_custom_call.1} parent=85 // pred_check_branch
          %1414 = sbr.rel (%p1412) target = $region90
        $region89: #{tpu_custom_call.1} parent=85 // pred_region
          %s1415 = sand.u32 %s204, 1
          %s1416 = scalar_lea.sflag [#allocation8], %s1415
          %s1417 = sand.u32 %s204, 1
          %s1418 = scalar_lea.vmem [#allocation11], %s1417
          %1420 = dma.done %s1416, 16
        $region90: #{tpu_custom_call.1} parent=85 // pred_fallthru
          _
        // Predicated region
        $region91: #{tpu_custom_call.1} parent=85 // pred_check
          %p1421 = pneg %p245
        $region92: #{tpu_custom_call.1} parent=85 // pred_check_branch
          %1423 = sbr.rel (%p1421) target = $region94
        $region93: #{tpu_custom_call.1} parent=85 // pred_region
          %s1424 = sand.u32 %s39, 1
          %s1425 = scalar_lea.sflag [#allocation13], %s1424
          %s1426 = sand.u32 %s230, 1
          %s1427 = scalar_lea.vmem [#allocation12], %s1426
          %1429 = dma.done %s1425, 16
        $region94: #{tpu_custom_call.1} parent=85 // pred_fallthru
          _
        // Predicated region
        $region95: #{tpu_custom_call.1} parent=85 // pred_check
          %p1430 = pneg %p271
        $region96: #{tpu_custom_call.1} parent=85 // pred_check_branch
          %1432 = sbr.rel (%p1430) target = $region98
        $region97: #{tpu_custom_call.1} parent=85 // pred_region
          %s1433 = sand.u32 %s39, 1
          %s1434 = scalar_lea.sflag [#allocation13], %s1433
          %s1435 = sand.u32 %s256, 1
          %s1436 = smul.addr %s1435, 8
          %s1437 = scalar_lea.vmem [#allocation14], %s1436
          %1439 = dma.done %s1434, 128
        $region98: #{tpu_custom_call.1} parent=85 // pred_fallthru
          _
      $region86: #{tpu_custom_call.1} parent=5 // pred_fallthru
        _
    $region6: #{tpu_custom_call.1} parent=1 // loop_footer
      %s37 = sadd.s32 1, %s33
    $region7: #{tpu_custom_call.1} parent=1 // loop_footer_branch
      %32 = sbr.rel target = $region3
    $region8: #{tpu_custom_call.1} parent=1 // loop_exit
      _
    %1440 = vsyncpa [#allocation7], 1
    %s1441 = scalar_lea.sflag [#allocation7], 1
    %1442 = vsyncpa %s1441, 1
    %1443 = vsyncpa [#allocation10], 1
    %1444 = vsyncpa [#allocation8], 1
    %s1445 = scalar_lea.sflag [#allocation8], 1
    %1446 = vsyncpa %s1445, 1
    %1447 = vsyncpa [#allocation13], 1
    %s1448 = scalar_lea.sflag [#allocation13], 1
    %1449 = vsyncpa %s1448, 1

</llo_original>
